<compile_context>
chip_gen: v7x
topology: tpu7x:2x2x1
jax: 0.10.0
libtpu: 0.0.40
codegen_flags: <defaults>
</compile_context>

<pallas_src>
import functools

import jax
import jax.numpy as jnp
from jax.experimental import pallas as pl
from jax.experimental.pallas import tpu as pltpu


def _round_up(x, m):
    return (x + m - 1) // m * m


# ----------------------------- Pallas kernel ------------------------------- #
def _masked_lstm_kernel(x_ref, len_ref, wcat_ref, bias_ref,
                        out_ref, ht_ref, ct_ref, h_sc, c_sc,
                        *, hidden, block_t):
    """Runs `block_t` masked-LSTM steps with the input projection fused into
    the recurrence matmul.  Grid = (batch_blocks, time_blocks); time (axis 1)
    is the sequential recurrence, the h/c carry lives in VMEM scratch."""
    tb = pl.program_id(1)

    @pl.when(tb == 0)
    def _():
        # Zero initial state.  NOTE: the padded hidden lanes stay exactly 0
        # only because the padded weight/bias gate columns are zero AND h/c
        # start at 0 -- do not feed a nonzero initial state through this path.
        h_sc[...] = jnp.zeros_like(h_sc)
        c_sc[...] = jnp.zeros_like(c_sc)

    H = hidden
    w_cat = wcat_ref[...]          # (E+H, 4H) bf16, resident (constant block)
    bias = bias_ref[...]           # (1, 4H) f32, resident
    lens = len_ref[...]            # (block_b, 1) int32, per batch block
    t0 = tb * block_t

    def sigmoid(z):                # logistic via tanh: single EUP pass
        return 0.5 * jnp.tanh(0.5 * z) + 0.5

    h = h_sc[...]
    c = c_sc[...]
    # Static Python unroll -> every ref index below is a compile-time constant.
    for j in range(block_t):
        # Fused input + recurrence projection: one 2-D MXU matmul per step.
        xh = jnp.concatenate([x_ref[j], h.astype(w_cat.dtype)], axis=1)
        gates = jnp.dot(xh, w_cat, preferred_element_type=jnp.float32) + bias
        # PyTorch LSTMCell gate order i, f, g, o; slices are 128-lane aligned.
        i_g = sigmoid(gates[:, 0:H])
        f_g = sigmoid(gates[:, H:2 * H])
        g_g = jnp.tanh(gates[:, 2 * H:3 * H])
        o_g = sigmoid(gates[:, 3 * H:4 * H])
        c_new = f_g * c + i_g * g_g
        h_new = o_g * jnp.tanh(c_new)
        # Masked update: padded steps (t >= length) keep the previous state.
        keep = lens > (t0 + j)                       # (block_b, 1) bool
        h = jnp.where(keep, h_new, h)
        c = jnp.where(keep, c_new, c)
        out_ref[:, j, :] = h                         # (batch, seq, H) layout
    h_sc[...] = h
    c_sc[...] = c

    @pl.when(tb == pl.num_programs(1) - 1)
    def _():
        ht_ref[...] = h
        ct_ref[...] = c


def masked_lstm_pallas(x_emb, lens, w_cat, bias, *, hidden, block_t, block_b,
                       vmem_limit_bytes=None):
    """x_emb: (seq_pad, batch_pad, E_pad) bf16 time-major embeddings.
       lens:  (batch_pad, 1) int32 lengths (mask == t < len).
       w_cat: (E_pad + H_pad, 4*H_pad) bf16 = [W_ih; W_hh], gate-packed i,f,g,o.
       bias:  (1, 4*H_pad) f32 = b_ih + b_hh."""
    seq_pad, batch_pad, e_pad = x_emb.shape
    h_pad = hidden
    assert w_cat.shape == (e_pad + h_pad, 4 * h_pad)
    assert seq_pad % block_t == 0 and batch_pad % block_b == 0
    assert block_t % 8 == 0 and block_b % 8 == 0 and h_pad % 128 == 0
    n_bb = batch_pad // block_b
    n_tb = seq_pad // block_t

    kernel = functools.partial(_masked_lstm_kernel, hidden=h_pad,
                               block_t=block_t)

    out_shapes = (
        jax.ShapeDtypeStruct((batch_pad, seq_pad, h_pad), jnp.float32),  # out
        jax.ShapeDtypeStruct((batch_pad, h_pad), jnp.float32),           # ht
        jax.ShapeDtypeStruct((batch_pad, h_pad), jnp.float32),           # ct
    )

    grid_spec = pltpu.PrefetchScalarGridSpec(
        num_scalar_prefetch=0,
        grid=(n_bb, n_tb),
        in_specs=[
            pl.BlockSpec((block_t, block_b, e_pad), lambda b, t: (t, b, 0)),
            pl.BlockSpec((block_b, 1), lambda b, t: (b, 0)),
            pl.BlockSpec((e_pad + h_pad, 4 * h_pad), lambda b, t: (0, 0)),
            pl.BlockSpec((1, 4 * h_pad), lambda b, t: (0, 0)),
        ],
        out_specs=[
            pl.BlockSpec((block_b, block_t, h_pad), lambda b, t: (b, t, 0)),
            pl.BlockSpec((block_b, h_pad), lambda b, t: (b, 0)),
            pl.BlockSpec((block_b, h_pad), lambda b, t: (b, 0)),
        ],
        scratch_shapes=[
            pltpu.VMEM((block_b, h_pad), jnp.float32),    # h carry
            pltpu.VMEM((block_b, h_pad), jnp.float32),    # c carry
        ],
    )

    # Explicit VMEM budget (double-buffered blocks + scratch).  Only raise the
    # scoped limit if the default (~32 MiB) would not fit; cap at v7x's 64 MiB.
    bf16_b, f32_b = 2, 4
    vmem_need = (
        2 * block_t * block_b * e_pad * bf16_b            # x blocks
        + 2 * block_b * 1 * 4                             # lens
        + 2 * (e_pad + h_pad) * 4 * h_pad * bf16_b        # W_cat
        + 2 * 4 * h_pad * f32_b                           # bias
        + 2 * block_b * block_t * h_pad * f32_b           # out blocks
        + 2 * 2 * block_b * h_pad * f32_b                 # ht, ct blocks
        + 2 * block_b * h_pad * f32_b)                    # h/c scratch
    if vmem_limit_bytes is None and vmem_need > 28 * (1 << 20):
        vmem_limit_bytes = min(int(vmem_need * 3 // 2), 64 * (1 << 20))

    cost = pl.CostEstimate(
        flops=(2 * seq_pad * batch_pad * (e_pad + h_pad) * 4 * h_pad
               + 12 * seq_pad * batch_pad * h_pad),
        transcendentals=5 * seq_pad * batch_pad * h_pad,
        bytes_accessed=(x_emb.size * bf16_b + w_cat.size * bf16_b
                        + bias.size * f32_b + lens.size * 4
                        + (batch_pad * seq_pad * h_pad
                           + 2 * batch_pad * h_pad) * f32_b))

    return pl.pallas_call(
        kernel,
        out_shape=out_shapes,
        grid_spec=grid_spec,
        cost_estimate=cost,
        compiler_params=pltpu.CompilerParams(
            # batch blocks independent (v7x 2-TC split); time is sequential.
            dimension_semantics=("parallel", "arbitrary"),
            vmem_limit_bytes=vmem_limit_bytes),
    )(x_emb, lens, w_cat, bias)


# ------------------------------- Wrapper ------------------------------------ #
def _pad_gate_cols(w, h, h_pad):
    """Zero-pad each of the 4 gate segments along the last axis: 4h -> 4*h_pad."""
    if h_pad == h:
        return w
    lead = w.shape[0]
    w4 = w.reshape(lead, 4, h)
    out = jnp.zeros((lead, 4, h_pad), w.dtype).at[:, :, :h].set(w4)
    return out.reshape(lead, 4 * h_pad)


def encoder_rnn_forward(inputs, lengths, params, *, no_language_feats=False,
                        block_t=8, block_b=None, vmem_limit_bytes=None):
    """inputs: (batch, seq) int32 vocab indices; lengths: (batch,) int32.

    block_t: LSTM steps per grid step (multiple of 8; 16-32 amortizes pipeline
    overhead better at production seq).  block_b: batch rows per grid step
    (multiple of 8); default = whole padded batch.  On v7x pass
    block_b = batch_pad // 2 so the 'parallel' grid axis has >= 2 blocks.
    """
    batch, seq = inputs.shape
    lengths = jnp.asarray(lengths, dtype=jnp.int32)
    emb_table = params["embedding"]                    # (V, E)
    w_ih = params["w_ih"]                              # (E, 4H) gates i,f,g,o
    w_hh = params["w_hh"]                              # (H, 4H)
    bias = params["bias"]                              # (1, 4H) = b_ih + b_hh
    hidden = w_hh.shape[0]
    emb = w_ih.shape[0]

    # Lane/sublane-friendly padded sizes (no-ops when already aligned).
    h_pad = _round_up(hidden, 128)
    e_pad = _round_up(emb, 128)
    batch_pad = _round_up(batch, 8)
    assert block_t % 8 == 0
    seq_pad = _round_up(seq, block_t)
    if block_b is None:
        block_b = batch_pad
    assert block_b % 8 == 0 and batch_pad % block_b == 0

    # Gate-packed, hidden-padded weights.  Padded gate columns / contraction
    # rows are zero, so the extra hidden units stay exactly 0 through the
    # recurrence (given zero initial state).
    w_ih_p = _pad_gate_cols(w_ih, hidden, h_pad)                    # (E, 4Hp)
    w_ih_p = jnp.pad(w_ih_p, ((0, e_pad - emb), (0, 0)))            # (Ep, 4Hp)
    w_hh_p = _pad_gate_cols(w_hh, hidden, h_pad)                    # (H, 4Hp)
    w_hh_p = jnp.pad(w_hh_p, ((0, h_pad - hidden), (0, 0)))         # (Hp, 4Hp)
    bias_p = _pad_gate_cols(bias, hidden, h_pad)                    # (1, 4Hp)
    # Single resident weight for the fused per-step matmul: [x, h] @ W_cat.
    w_cat = jnp.concatenate([w_ih_p, w_hh_p], axis=0).astype(jnp.bfloat16)

    # Time-major bf16 embedding gather (transpose the int32 indices, not the
    # float embeds).  nn.Embedding padding_idx row is zero; eval dropout = id.
    x_tbe = jnp.take(emb_table, inputs.T.astype(jnp.int32), axis=0)  # (S,B,E)
    x_tbe = jnp.pad(x_tbe.astype(jnp.bfloat16),
                    ((0, seq_pad - seq), (0, batch_pad - batch),
                     (0, e_pad - emb)))

    # create_mask(b, t) == (t < length[b]); the kernel consumes lengths.
    lens = jnp.pad(lengths, (0, batch_pad - batch))[:, None]

    out_p, ht_p, ct_p = masked_lstm_pallas(
        x_tbe, lens, w_cat, bias_p.astype(jnp.float32),
        hidden=h_pad, block_t=block_t, block_b=block_b,
        vmem_limit_bytes=vmem_limit_bytes)

    output = out_p[:batch, :seq, :hidden]              # already (B, S, H)
    ht = ht_p[:batch, :hidden]
    ct = ct_p[:batch, :hidden]

    mask = (jnp.arange(seq)[None, :] < lengths[:, None]).astype(jnp.float32)

    if no_language_feats:
        output = jnp.zeros_like(output)
        ht = jnp.zeros_like(ht)
        ct = jnp.zeros_like(ct)

    # ht/ct already (batch, H) == ht.squeeze()/ct.squeeze() for num_layers=1.
    return output, ht, ct, mask


# ----------------------------- Reference (JAX) ------------------------------ #
def _reference_lstm(x_tbe, mask_tb, w_ih, w_hh, bias):
    seq, batch, _ = x_tbe.shape
    H = w_hh.shape[0]
    h = jnp.zeros((batch, H), jnp.float32)
    c = jnp.zeros((batch, H), jnp.float32)
    outs = []
    for t in range(seq):
        g = x_tbe[t] @ w_ih + h @ w_hh + bias
        i, f, gg, o = (jax.nn.sigmoid(g[:, :H]), jax.nn.sigmoid(g[:, H:2*H]),
                       jnp.tanh(g[:, 2*H:3*H]), jax.nn.sigmoid(g[:, 3*H:4*H]))
        c_new = f * c + i * gg
        h_new = o * jnp.tanh(c_new)
        m = mask_tb[t][:, None]
        h = h_new * m + h * (1 - m)
        c = c_new * m + c * (1 - m)
        outs.append(h)
    return jnp.stack(outs, 0), h, c


def _make_params(key, vocab_size, embedding_size, hidden_size, padding_idx):
    k_emb, k_wih, k_whh, k_bih, k_bhh = jax.random.split(key, 5)
    emb_table = 0.1 * jax.random.normal(k_emb, (vocab_size, embedding_size),
                                        jnp.float32)
    emb_table = emb_table.at[padding_idx].set(0.0)      # padding_idx row -> 0
    # nn.LSTMCell params: weight_ih (4H, E), weight_hh (4H, H), b_ih, b_hh (4H)
    # Pre-transposed weights and pre-summed biases for the kernel.
    w_ih = 0.1 * jax.random.normal(k_wih, (4 * hidden_size, embedding_size),
                                   jnp.float32).T                     # (E, 4H)
    w_hh = 0.1 * jax.random.normal(k_whh, (4 * hidden_size, hidden_size),
                                   jnp.float32).T                     # (H, 4H)
    bias = (0.1 * jax.random.normal(k_bih, (4 * hidden_size,), jnp.float32)
            + 0.1 * jax.random.normal(k_bhh, (4 * hidden_size,), jnp.float32)
            )[None, :]                                                # (1, 4H)
    return {"embedding": emb_table, "w_ih": w_ih, "w_hh": w_hh, "bias": bias}


def _run_case(key, *, vocab, emb, hidden, batch, seq, lengths, padding_idx=0,
              block_b=None, atol=2e-2):
    k_p, k_in = jax.random.split(key)
    params = _make_params(k_p, vocab, emb, hidden, padding_idx)
    inputs = jax.random.randint(k_in, (batch, seq), 1, vocab, jnp.int32)
    lengths = jnp.asarray(lengths, jnp.int32)
    col = jnp.arange(seq)[None, :]
    inputs = jnp.where(col < lengths[:, None], inputs, padding_idx)

    output, ht, ct, mask = encoder_rnn_forward(inputs, lengths, params,
                                               block_b=block_b)
    jax.block_until_ready((output, ht, ct, mask))

    # Pure-JAX f32 reference of the same math (bf16 MXU operands in the
    # kernel -> slightly looser tolerance).
    embeds = jnp.take(params["embedding"], inputs, axis=0)
    x_tbe = jnp.transpose(embeds, (1, 0, 2))
    m_tb = jnp.transpose((col < lengths[:, None]).astype(jnp.float32), (1, 0))
    ref_out_tbh, ref_h, ref_c = _reference_lstm(
        x_tbe, m_tb, params["w_ih"], params["w_hh"], params["bias"])
    ref_out = jnp.transpose(ref_out_tbh, (1, 0, 2))

    assert output.shape == (batch, seq, hidden)
    assert ht.shape == (batch, hidden) and ct.shape == (batch, hidden)
    assert mask.shape == (batch, seq)
    assert jnp.allclose(mask, jnp.transpose(m_tb, (1, 0))), "mask mismatch"
    assert jnp.allclose(output, ref_out, atol=atol), "output mismatch"
    assert jnp.allclose(ht, ref_h, atol=atol), "ht mismatch"
    assert jnp.allclose(ct, ref_c, atol=atol), "ct mismatch"


# --------------------------------- Main ------------------------------------- #
if __name__ == "__main__":
    key = jax.random.PRNGKey(0)
    k1, k2 = jax.random.split(key)

    # Case 1: small shapes consistent with the module (single grid step).
    _run_case(k1, vocab=100, emb=32, hidden=32, batch=2, seq=8,
              lengths=[8, 5])

    # Case 2: exercises padding on every axis plus a multi-block grid
    # (batch_pad=16 with block_b=8 -> 2 'parallel' batch blocks; seq_pad=24
    # -> 3 sequential time blocks with the carry crossing block boundaries).
    _run_case(k2, vocab=120, emb=40, hidden=96, batch=10, seq=21,
              lengths=[21, 5, 13, 1, 21, 8, 17, 3, 10, 21], block_b=8)

    # TODO(synk): bidirectional / multi-layer / use_linear / share_embedding
    # variants and training-mode dropout are not exercised by the default
    # config and are omitted.
    print("KERNEL_OK")
</pallas_src>

<mosaic_0001>
module attributes {stable_mosaic.version = 11 : i64} {
  func.func @_masked_lstm_kernel(%arg0: i32, %arg1: i32, %arg2: memref<8x8x128xbf16, #tpu.memory_space<vmem>>, %arg3: memref<8x1xi32, #tpu.memory_space<vmem>>, %arg4: memref<256x512xbf16, #tpu.memory_space<vmem>>, %arg5: memref<1x512xf32, #tpu.memory_space<vmem>>, %arg6: memref<8x8x128xf32, #tpu.memory_space<vmem>>, %arg7: memref<8x128xf32, #tpu.memory_space<vmem>>, %arg8: memref<8x128xf32, #tpu.memory_space<vmem>>, %arg9: memref<8x128xf32, #tpu.memory_space<vmem>>, %arg10: memref<8x128xf32, #tpu.memory_space<vmem>>) attributes {dimension_semantics = [#tpu.dimension_semantics<parallel>, #tpu.dimension_semantics<arbitrary>], iteration_bounds = array<i64: 1, 1>, scalar_prefetch = 0 : i64, scratch_operands = 2 : i64, tpu.core_type = #tpu.core_type<tc>, window_params = [{transform_indices = @transform_0, window_bounds = array<i64: 8, 8, 128>}, {transform_indices = @transform_1, window_bounds = array<i64: 8, 1>}, {pipeline_mode = #tpu.pipeline_mode<synchronous>, transform_indices = @transform_2, window_bounds = array<i64: 256, 512>}, {pipeline_mode = #tpu.pipeline_mode<synchronous>, transform_indices = @transform_3, window_bounds = array<i64: 1, 512>}, {transform_indices = @transform_4, window_bounds = array<i64: 8, 8, 128>}, {transform_indices = @transform_5, window_bounds = array<i64: 8, 128>}, {transform_indices = @transform_6, window_bounds = array<i64: 8, 128>}]} {
    %c0_i32 = arith.constant 0 : i32
    %0 = arith.cmpi eq, %arg1, %c0_i32 : i32
    %1 = arith.extui %0 : i1 to i32
    %c0_i32_0 = arith.constant 0 : i32
    %2 = arith.cmpi ne, %1, %c0_i32_0 : i32
    scf.if %2 {
      %cst_137 = arith.constant 0.000000e+00 : f32
      %414 = vector.broadcast %cst_137 : f32 to vector<8x128xf32>
      %c0_138 = arith.constant 0 : index
      %c0_139 = arith.constant 0 : index
      %415 = vector.load %arg9[%c0_138, %c0_139] : memref<8x128xf32, #tpu.memory_space<vmem>>, vector<8x128xf32>
      tpu.vector_store %arg9[%c0_138, %c0_139], %414 {strides = array<i32>} : memref<8x128xf32, #tpu.memory_space<vmem>>, vector<8x128xf32>,
      %cst_140 = arith.constant 0.000000e+00 : f32
      %416 = vector.broadcast %cst_140 : f32 to vector<8x128xf32>
      %c0_141 = arith.constant 0 : index
      %c0_142 = arith.constant 0 : index
      %417 = vector.load %arg10[%c0_141, %c0_142] : memref<8x128xf32, #tpu.memory_space<vmem>>, vector<8x128xf32>
      tpu.vector_store %arg10[%c0_141, %c0_142], %416 {strides = array<i32>} : memref<8x128xf32, #tpu.memory_space<vmem>>, vector<8x128xf32>,
    } else {
    }
    %c0 = arith.constant 0 : index
    %c0_1 = arith.constant 0 : index
    %3 = vector.load %arg4[%c0, %c0_1] : memref<256x512xbf16, #tpu.memory_space<vmem>>, vector<256x512xbf16>
    %c0_2 = arith.constant 0 : index
    %c0_3 = arith.constant 0 : index
    %4 = vector.load %arg5[%c0_2, %c0_3] : memref<1x512xf32, #tpu.memory_space<vmem>>, vector<1x512xf32>
    %c0_4 = arith.constant 0 : index
    %c0_5 = arith.constant 0 : index
    %5 = vector.load %arg3[%c0_4, %c0_5] : memref<8x1xi32, #tpu.memory_space<vmem>>, vector<8x1xi32>
    %c8_i32 = arith.constant 8 : i32
    %6 = arith.muli %arg1, %c8_i32 : i32
    %c0_6 = arith.constant 0 : index
    %c0_7 = arith.constant 0 : index
    %7 = vector.load %arg9[%c0_6, %c0_7] : memref<8x128xf32, #tpu.memory_space<vmem>>, vector<8x128xf32>
    %c0_8 = arith.constant 0 : index
    %c0_9 = arith.constant 0 : index
    %8 = vector.load %arg10[%c0_8, %c0_9] : memref<8x128xf32, #tpu.memory_space<vmem>>, vector<8x128xf32>
    %c0_10 = arith.constant 0 : index
    %c0_11 = arith.constant 0 : index
    %c0_12 = arith.constant 0 : index
    %9 = vector.load %arg2[%c0_10, %c0_11, %c0_12] : memref<8x8x128xbf16, #tpu.memory_space<vmem>>, vector<1x8x128xbf16>
    %10 = vector.shape_cast %9 : vector<1x8x128xbf16> to vector<8x128xbf16>
    %11 = arith.truncf %7 : vector<8x128xf32> to vector<8x128xbf16>
    %12 = tpu.concatenate %10, %11 in 1 : vector<8x128xbf16>, vector<8x128xbf16> -> vector<8x256xbf16>
    %cst = arith.constant dense<0.000000e+00> : vector<8x512xf32>
    %13 = tpu.matmul %12, %3, %cst {dimension_numbers = #tpu.dot_dimension_numbers<[1], [0], [0], [1], [0, 0, 1, 1], [], []>} : vector<8x256xbf16>, vector<256x512xbf16>, vector<8x512xf32> -> vector<8x512xf32>
    %14 = vector.broadcast %4 : vector<1x512xf32> to vector<8x512xf32>
    %15 = arith.addf %13, %14 : vector<8x512xf32>
    %16 = vector.extract_strided_slice %15 {offsets = [0, 0], sizes = [8, 128], strides = [1, 1]} : vector<8x512xf32> to vector<8x128xf32>
    %cst_13 = arith.constant 5.000000e-01 : f32
    %17 = vector.broadcast %cst_13 : f32 to vector<8x128xf32>
    %18 = arith.mulf %17, %16 : vector<8x128xf32>
    %19 = math.tanh %18 : vector<8x128xf32>
    %cst_14 = arith.constant 5.000000e-01 : f32
    %20 = vector.broadcast %cst_14 : f32 to vector<8x128xf32>
    %21 = arith.mulf %20, %19 : vector<8x128xf32>
    %cst_15 = arith.constant 5.000000e-01 : f32
    %22 = vector.broadcast %cst_15 : f32 to vector<8x128xf32>
    %23 = arith.addf %21, %22 : vector<8x128xf32>
    %24 = vector.extract_strided_slice %15 {offsets = [0, 128], sizes = [8, 128], strides = [1, 1]} : vector<8x512xf32> to vector<8x128xf32>
    %cst_16 = arith.constant 5.000000e-01 : f32
    %25 = vector.broadcast %cst_16 : f32 to vector<8x128xf32>
    %26 = arith.mulf %25, %24 : vector<8x128xf32>
    %27 = math.tanh %26 : vector<8x128xf32>
    %cst_17 = arith.constant 5.000000e-01 : f32
    %28 = vector.broadcast %cst_17 : f32 to vector<8x128xf32>
    %29 = arith.mulf %28, %27 : vector<8x128xf32>
    %cst_18 = arith.constant 5.000000e-01 : f32
    %30 = vector.broadcast %cst_18 : f32 to vector<8x128xf32>
    %31 = arith.addf %29, %30 : vector<8x128xf32>
    %32 = vector.extract_strided_slice %15 {offsets = [0, 256], sizes = [8, 128], strides = [1, 1]} : vector<8x512xf32> to vector<8x128xf32>
    %33 = math.tanh %32 : vector<8x128xf32>
    %34 = vector.extract_strided_slice %15 {offsets = [0, 384], sizes = [8, 128], strides = [1, 1]} : vector<8x512xf32> to vector<8x128xf32>
    %cst_19 = arith.constant 5.000000e-01 : f32
    %35 = vector.broadcast %cst_19 : f32 to vector<8x128xf32>
    %36 = arith.mulf %35, %34 : vector<8x128xf32>
    %37 = math.tanh %36 : vector<8x128xf32>
    %cst_20 = arith.constant 5.000000e-01 : f32
    %38 = vector.broadcast %cst_20 : f32 to vector<8x128xf32>
    %39 = arith.mulf %38, %37 : vector<8x128xf32>
    %cst_21 = arith.constant 5.000000e-01 : f32
    %40 = vector.broadcast %cst_21 : f32 to vector<8x128xf32>
    %41 = arith.addf %39, %40 : vector<8x128xf32>
    %42 = arith.mulf %31, %8 : vector<8x128xf32>
    %43 = arith.mulf %23, %33 : vector<8x128xf32>
    %44 = arith.addf %42, %43 : vector<8x128xf32>
    %45 = math.tanh %44 : vector<8x128xf32>
    %46 = arith.mulf %41, %45 : vector<8x128xf32>
    %c0_i32_22 = arith.constant 0 : i32
    %47 = arith.addi %6, %c0_i32_22 : i32
    %48 = vector.broadcast %47 : i32 to vector<8x1xi32>
    %49 = arith.cmpi sgt, %5, %48 : vector<8x1xi32>
    %50 = vector.shape_cast %49 : vector<8x1xi1> to vector<8x1xi1>
    %51 = vector.broadcast %50 : vector<8x1xi1> to vector<8x128xi1>
    %52 = arith.select %51, %46, %7 : vector<8x128xi1>, vector<8x128xf32>
    %53 = vector.shape_cast %49 : vector<8x1xi1> to vector<8x1xi1>
    %54 = vector.broadcast %53 : vector<8x1xi1> to vector<8x128xi1>
    %55 = arith.select %54, %44, %8 : vector<8x128xi1>, vector<8x128xf32>
    %c0_23 = arith.constant 0 : index
    %c0_24 = arith.constant 0 : index
    %c0_25 = arith.constant 0 : index
    %56 = vector.load %arg6[%c0_23, %c0_24, %c0_25] : memref<8x8x128xf32, #tpu.memory_space<vmem>>, vector<8x1x128xf32>
    %57 = vector.shape_cast %56 : vector<8x1x128xf32> to vector<8x128xf32>
    %58 = vector.shape_cast %52 : vector<8x128xf32> to vector<8x1x128xf32>
    tpu.vector_store %arg6[%c0_23, %c0_24, %c0_25], %58 {strides = array<i32>} : memref<8x8x128xf32, #tpu.memory_space<vmem>>, vector<8x1x128xf32>,
    %c1 = arith.constant 1 : index
    %c0_26 = arith.constant 0 : index
    %c0_27 = arith.constant 0 : index
    %59 = vector.load %arg2[%c1, %c0_26, %c0_27] : memref<8x8x128xbf16, #tpu.memory_space<vmem>>, vector<1x8x128xbf16>
    %60 = vector.shape_cast %59 : vector<1x8x128xbf16> to vector<8x128xbf16>
    %61 = arith.truncf %52 : vector<8x128xf32> to vector<8x128xbf16>
    %62 = tpu.concatenate %60, %61 in 1 : vector<8x128xbf16>, vector<8x128xbf16> -> vector<8x256xbf16>
    %cst_28 = arith.constant dense<0.000000e+00> : vector<8x512xf32>
    %63 = tpu.matmul %62, %3, %cst_28 {dimension_numbers = #tpu.dot_dimension_numbers<[1], [0], [0], [1], [0, 0, 1, 1], [], []>} : vector<8x256xbf16>, vector<256x512xbf16>, vector<8x512xf32> -> vector<8x512xf32>
    %64 = vector.broadcast %4 : vector<1x512xf32> to vector<8x512xf32>
    %65 = arith.addf %63, %64 : vector<8x512xf32>
    %66 = vector.extract_strided_slice %65 {offsets = [0, 0], sizes = [8, 128], strides = [1, 1]} : vector<8x512xf32> to vector<8x128xf32>
    %cst_29 = arith.constant 5.000000e-01 : f32
    %67 = vector.broadcast %cst_29 : f32 to vector<8x128xf32>
    %68 = arith.mulf %67, %66 : vector<8x128xf32>
    %69 = math.tanh %68 : vector<8x128xf32>
    %cst_30 = arith.constant 5.000000e-01 : f32
    %70 = vector.broadcast %cst_30 : f32 to vector<8x128xf32>
    %71 = arith.mulf %70, %69 : vector<8x128xf32>
    %cst_31 = arith.constant 5.000000e-01 : f32
    %72 = vector.broadcast %cst_31 : f32 to vector<8x128xf32>
    %73 = arith.addf %71, %72 : vector<8x128xf32>
    %74 = vector.extract_strided_slice %65 {offsets = [0, 128], sizes = [8, 128], strides = [1, 1]} : vector<8x512xf32> to vector<8x128xf32>
    %cst_32 = arith.constant 5.000000e-01 : f32
    %75 = vector.broadcast %cst_32 : f32 to vector<8x128xf32>
    %76 = arith.mulf %75, %74 : vector<8x128xf32>
    %77 = math.tanh %76 : vector<8x128xf32>
    %cst_33 = arith.constant 5.000000e-01 : f32
    %78 = vector.broadcast %cst_33 : f32 to vector<8x128xf32>
    %79 = arith.mulf %78, %77 : vector<8x128xf32>
    %cst_34 = arith.constant 5.000000e-01 : f32
    %80 = vector.broadcast %cst_34 : f32 to vector<8x128xf32>
    %81 = arith.addf %79, %80 : vector<8x128xf32>
    %82 = vector.extract_strided_slice %65 {offsets = [0, 256], sizes = [8, 128], strides = [1, 1]} : vector<8x512xf32> to vector<8x128xf32>
    %83 = math.tanh %82 : vector<8x128xf32>
    %84 = vector.extract_strided_slice %65 {offsets = [0, 384], sizes = [8, 128], strides = [1, 1]} : vector<8x512xf32> to vector<8x128xf32>
    %cst_35 = arith.constant 5.000000e-01 : f32
    %85 = vector.broadcast %cst_35 : f32 to vector<8x128xf32>
    %86 = arith.mulf %85, %84 : vector<8x128xf32>
    %87 = math.tanh %86 : vector<8x128xf32>
    %cst_36 = arith.constant 5.000000e-01 : f32
    %88 = vector.broadcast %cst_36 : f32 to vector<8x128xf32>
    %89 = arith.mulf %88, %87 : vector<8x128xf32>
    %cst_37 = arith.constant 5.000000e-01 : f32
    %90 = vector.broadcast %cst_37 : f32 to vector<8x128xf32>
    %91 = arith.addf %89, %90 : vector<8x128xf32>
    %92 = arith.mulf %81, %55 : vector<8x128xf32>
    %93 = arith.mulf %73, %83 : vector<8x128xf32>
    %94 = arith.addf %92, %93 : vector<8x128xf32>
    %95 = math.tanh %94 : vector<8x128xf32>
    %96 = arith.mulf %91, %95 : vector<8x128xf32>
    %c1_i32 = arith.constant 1 : i32
    %97 = arith.addi %6, %c1_i32 : i32
    %98 = vector.broadcast %97 : i32 to vector<8x1xi32>
    %99 = arith.cmpi sgt, %5, %98 : vector<8x1xi32>
    %100 = vector.shape_cast %99 : vector<8x1xi1> to vector<8x1xi1>
    %101 = vector.broadcast %100 : vector<8x1xi1> to vector<8x128xi1>
    %102 = arith.select %101, %96, %52 : vector<8x128xi1>, vector<8x128xf32>
    %103 = vector.shape_cast %99 : vector<8x1xi1> to vector<8x1xi1>
    %104 = vector.broadcast %103 : vector<8x1xi1> to vector<8x128xi1>
    %105 = arith.select %104, %94, %55 : vector<8x128xi1>, vector<8x128xf32>
    %c0_38 = arith.constant 0 : index
    %c1_39 = arith.constant 1 : index
    %c0_40 = arith.constant 0 : index
    %106 = vector.load %arg6[%c0_38, %c1_39, %c0_40] : memref<8x8x128xf32, #tpu.memory_space<vmem>>, vector<8x1x128xf32>
    %107 = vector.shape_cast %106 : vector<8x1x128xf32> to vector<8x128xf32>
    %108 = vector.shape_cast %102 : vector<8x128xf32> to vector<8x1x128xf32>
    tpu.vector_store %arg6[%c0_38, %c1_39, %c0_40], %108 {strides = array<i32>} : memref<8x8x128xf32, #tpu.memory_space<vmem>>, vector<8x1x128xf32>,
    %c2 = arith.constant 2 : index
    %c0_41 = arith.constant 0 : index
    %c0_42 = arith.constant 0 : index
    %109 = vector.load %arg2[%c2, %c0_41, %c0_42] : memref<8x8x128xbf16, #tpu.memory_space<vmem>>, vector<1x8x128xbf16>
    %110 = vector.shape_cast %109 : vector<1x8x128xbf16> to vector<8x128xbf16>
    %111 = arith.truncf %102 : vector<8x128xf32> to vector<8x128xbf16>
    %112 = tpu.concatenate %110, %111 in 1 : vector<8x128xbf16>, vector<8x128xbf16> -> vector<8x256xbf16>
    %cst_43 = arith.constant dense<0.000000e+00> : vector<8x512xf32>
    %113 = tpu.matmul %112, %3, %cst_43 {dimension_numbers = #tpu.dot_dimension_numbers<[1], [0], [0], [1], [0, 0, 1, 1], [], []>} : vector<8x256xbf16>, vector<256x512xbf16>, vector<8x512xf32> -> vector<8x512xf32>
    %114 = vector.broadcast %4 : vector<1x512xf32> to vector<8x512xf32>
    %115 = arith.addf %113, %114 : vector<8x512xf32>
    %116 = vector.extract_strided_slice %115 {offsets = [0, 0], sizes = [8, 128], strides = [1, 1]} : vector<8x512xf32> to vector<8x128xf32>
    %cst_44 = arith.constant 5.000000e-01 : f32
    %117 = vector.broadcast %cst_44 : f32 to vector<8x128xf32>
    %118 = arith.mulf %117, %116 : vector<8x128xf32>
    %119 = math.tanh %118 : vector<8x128xf32>
    %cst_45 = arith.constant 5.000000e-01 : f32
    %120 = vector.broadcast %cst_45 : f32 to vector<8x128xf32>
    %121 = arith.mulf %120, %119 : vector<8x128xf32>
    %cst_46 = arith.constant 5.000000e-01 : f32
    %122 = vector.broadcast %cst_46 : f32 to vector<8x128xf32>
    %123 = arith.addf %121, %122 : vector<8x128xf32>
    %124 = vector.extract_strided_slice %115 {offsets = [0, 128], sizes = [8, 128], strides = [1, 1]} : vector<8x512xf32> to vector<8x128xf32>
    %cst_47 = arith.constant 5.000000e-01 : f32
    %125 = vector.broadcast %cst_47 : f32 to vector<8x128xf32>
    %126 = arith.mulf %125, %124 : vector<8x128xf32>
    %127 = math.tanh %126 : vector<8x128xf32>
    %cst_48 = arith.constant 5.000000e-01 : f32
    %128 = vector.broadcast %cst_48 : f32 to vector<8x128xf32>
    %129 = arith.mulf %128, %127 : vector<8x128xf32>
    %cst_49 = arith.constant 5.000000e-01 : f32
    %130 = vector.broadcast %cst_49 : f32 to vector<8x128xf32>
    %131 = arith.addf %129, %130 : vector<8x128xf32>
    %132 = vector.extract_strided_slice %115 {offsets = [0, 256], sizes = [8, 128], strides = [1, 1]} : vector<8x512xf32> to vector<8x128xf32>
    %133 = math.tanh %132 : vector<8x128xf32>
    %134 = vector.extract_strided_slice %115 {offsets = [0, 384], sizes = [8, 128], strides = [1, 1]} : vector<8x512xf32> to vector<8x128xf32>
    %cst_50 = arith.constant 5.000000e-01 : f32
    %135 = vector.broadcast %cst_50 : f32 to vector<8x128xf32>
    %136 = arith.mulf %135, %134 : vector<8x128xf32>
    %137 = math.tanh %136 : vector<8x128xf32>
    %cst_51 = arith.constant 5.000000e-01 : f32
    %138 = vector.broadcast %cst_51 : f32 to vector<8x128xf32>
    %139 = arith.mulf %138, %137 : vector<8x128xf32>
    %cst_52 = arith.constant 5.000000e-01 : f32
    %140 = vector.broadcast %cst_52 : f32 to vector<8x128xf32>
    %141 = arith.addf %139, %140 : vector<8x128xf32>
    %142 = arith.mulf %131, %105 : vector<8x128xf32>
    %143 = arith.mulf %123, %133 : vector<8x128xf32>
    %144 = arith.addf %142, %143 : vector<8x128xf32>
    %145 = math.tanh %144 : vector<8x128xf32>
    %146 = arith.mulf %141, %145 : vector<8x128xf32>
    %c2_i32 = arith.constant 2 : i32
    %147 = arith.addi %6, %c2_i32 : i32
    %148 = vector.broadcast %147 : i32 to vector<8x1xi32>
    %149 = arith.cmpi sgt, %5, %148 : vector<8x1xi32>
    %150 = vector.shape_cast %149 : vector<8x1xi1> to vector<8x1xi1>
    %151 = vector.broadcast %150 : vector<8x1xi1> to vector<8x128xi1>
    %152 = arith.select %151, %146, %102 : vector<8x128xi1>, vector<8x128xf32>
    %153 = vector.shape_cast %149 : vector<8x1xi1> to vector<8x1xi1>
    %154 = vector.broadcast %153 : vector<8x1xi1> to vector<8x128xi1>
    %155 = arith.select %154, %144, %105 : vector<8x128xi1>, vector<8x128xf32>
    %c0_53 = arith.constant 0 : index
    %c2_54 = arith.constant 2 : index
    %c0_55 = arith.constant 0 : index
    %156 = vector.load %arg6[%c0_53, %c2_54, %c0_55] : memref<8x8x128xf32, #tpu.memory_space<vmem>>, vector<8x1x128xf32>
    %157 = vector.shape_cast %156 : vector<8x1x128xf32> to vector<8x128xf32>
    %158 = vector.shape_cast %152 : vector<8x128xf32> to vector<8x1x128xf32>
    tpu.vector_store %arg6[%c0_53, %c2_54, %c0_55], %158 {strides = array<i32>} : memref<8x8x128xf32, #tpu.memory_space<vmem>>, vector<8x1x128xf32>,
    %c3 = arith.constant 3 : index
    %c0_56 = arith.constant 0 : index
    %c0_57 = arith.constant 0 : index
    %159 = vector.load %arg2[%c3, %c0_56, %c0_57] : memref<8x8x128xbf16, #tpu.memory_space<vmem>>, vector<1x8x128xbf16>
    %160 = vector.shape_cast %159 : vector<1x8x128xbf16> to vector<8x128xbf16>
    %161 = arith.truncf %152 : vector<8x128xf32> to vector<8x128xbf16>
    %162 = tpu.concatenate %160, %161 in 1 : vector<8x128xbf16>, vector<8x128xbf16> -> vector<8x256xbf16>
    %cst_58 = arith.constant dense<0.000000e+00> : vector<8x512xf32>
    %163 = tpu.matmul %162, %3, %cst_58 {dimension_numbers = #tpu.dot_dimension_numbers<[1], [0], [0], [1], [0, 0, 1, 1], [], []>} : vector<8x256xbf16>, vector<256x512xbf16>, vector<8x512xf32> -> vector<8x512xf32>
    %164 = vector.broadcast %4 : vector<1x512xf32> to vector<8x512xf32>
    %165 = arith.addf %163, %164 : vector<8x512xf32>
    %166 = vector.extract_strided_slice %165 {offsets = [0, 0], sizes = [8, 128], strides = [1, 1]} : vector<8x512xf32> to vector<8x128xf32>
    %cst_59 = arith.constant 5.000000e-01 : f32
    %167 = vector.broadcast %cst_59 : f32 to vector<8x128xf32>
    %168 = arith.mulf %167, %166 : vector<8x128xf32>
    %169 = math.tanh %168 : vector<8x128xf32>
    %cst_60 = arith.constant 5.000000e-01 : f32
    %170 = vector.broadcast %cst_60 : f32 to vector<8x128xf32>
    %171 = arith.mulf %170, %169 : vector<8x128xf32>
    %cst_61 = arith.constant 5.000000e-01 : f32
    %172 = vector.broadcast %cst_61 : f32 to vector<8x128xf32>
    %173 = arith.addf %171, %172 : vector<8x128xf32>
    %174 = vector.extract_strided_slice %165 {offsets = [0, 128], sizes = [8, 128], strides = [1, 1]} : vector<8x512xf32> to vector<8x128xf32>
    %cst_62 = arith.constant 5.000000e-01 : f32
    %175 = vector.broadcast %cst_62 : f32 to vector<8x128xf32>
    %176 = arith.mulf %175, %174 : vector<8x128xf32>
    %177 = math.tanh %176 : vector<8x128xf32>
    %cst_63 = arith.constant 5.000000e-01 : f32
    %178 = vector.broadcast %cst_63 : f32 to vector<8x128xf32>
    %179 = arith.mulf %178, %177 : vector<8x128xf32>
    %cst_64 = arith.constant 5.000000e-01 : f32
    %180 = vector.broadcast %cst_64 : f32 to vector<8x128xf32>
    %181 = arith.addf %179, %180 : vector<8x128xf32>
    %182 = vector.extract_strided_slice %165 {offsets = [0, 256], sizes = [8, 128], strides = [1, 1]} : vector<8x512xf32> to vector<8x128xf32>
    %183 = math.tanh %182 : vector<8x128xf32>
    %184 = vector.extract_strided_slice %165 {offsets = [0, 384], sizes = [8, 128], strides = [1, 1]} : vector<8x512xf32> to vector<8x128xf32>
    %cst_65 = arith.constant 5.000000e-01 : f32
    %185 = vector.broadcast %cst_65 : f32 to vector<8x128xf32>
    %186 = arith.mulf %185, %184 : vector<8x128xf32>
    %187 = math.tanh %186 : vector<8x128xf32>
    %cst_66 = arith.constant 5.000000e-01 : f32
    %188 = vector.broadcast %cst_66 : f32 to vector<8x128xf32>
    %189 = arith.mulf %188, %187 : vector<8x128xf32>
    %cst_67 = arith.constant 5.000000e-01 : f32
    %190 = vector.broadcast %cst_67 : f32 to vector<8x128xf32>
    %191 = arith.addf %189, %190 : vector<8x128xf32>
    %192 = arith.mulf %181, %155 : vector<8x128xf32>
    %193 = arith.mulf %173, %183 : vector<8x128xf32>
    %194 = arith.addf %192, %193 : vector<8x128xf32>
    %195 = math.tanh %194 : vector<8x128xf32>
    %196 = arith.mulf %191, %195 : vector<8x128xf32>
    %c3_i32 = arith.constant 3 : i32
    %197 = arith.addi %6, %c3_i32 : i32
    %198 = vector.broadcast %197 : i32 to vector<8x1xi32>
    %199 = arith.cmpi sgt, %5, %198 : vector<8x1xi32>
    %200 = vector.shape_cast %199 : vector<8x1xi1> to vector<8x1xi1>
    %201 = vector.broadcast %200 : vector<8x1xi1> to vector<8x128xi1>
    %202 = arith.select %201, %196, %152 : vector<8x128xi1>, vector<8x128xf32>
    %203 = vector.shape_cast %199 : vector<8x1xi1> to vector<8x1xi1>
    %204 = vector.broadcast %203 : vector<8x1xi1> to vector<8x128xi1>
    %205 = arith.select %204, %194, %155 : vector<8x128xi1>, vector<8x128xf32>
    %c0_68 = arith.constant 0 : index
    %c3_69 = arith.constant 3 : index
    %c0_70 = arith.constant 0 : index
    %206 = vector.load %arg6[%c0_68, %c3_69, %c0_70] : memref<8x8x128xf32, #tpu.memory_space<vmem>>, vector<8x1x128xf32>
    %207 = vector.shape_cast %206 : vector<8x1x128xf32> to vector<8x128xf32>
    %208 = vector.shape_cast %202 : vector<8x128xf32> to vector<8x1x128xf32>
    tpu.vector_store %arg6[%c0_68, %c3_69, %c0_70], %208 {strides = array<i32>} : memref<8x8x128xf32, #tpu.memory_space<vmem>>, vector<8x1x128xf32>,
    %c4 = arith.constant 4 : index
    %c0_71 = arith.constant 0 : index
    %c0_72 = arith.constant 0 : index
    %209 = vector.load %arg2[%c4, %c0_71, %c0_72] : memref<8x8x128xbf16, #tpu.memory_space<vmem>>, vector<1x8x128xbf16>
    %210 = vector.shape_cast %209 : vector<1x8x128xbf16> to vector<8x128xbf16>
    %211 = arith.truncf %202 : vector<8x128xf32> to vector<8x128xbf16>
    %212 = tpu.concatenate %210, %211 in 1 : vector<8x128xbf16>, vector<8x128xbf16> -> vector<8x256xbf16>
    %cst_73 = arith.constant dense<0.000000e+00> : vector<8x512xf32>
    %213 = tpu.matmul %212, %3, %cst_73 {dimension_numbers = #tpu.dot_dimension_numbers<[1], [0], [0], [1], [0, 0, 1, 1], [], []>} : vector<8x256xbf16>, vector<256x512xbf16>, vector<8x512xf32> -> vector<8x512xf32>
    %214 = vector.broadcast %4 : vector<1x512xf32> to vector<8x512xf32>
    %215 = arith.addf %213, %214 : vector<8x512xf32>
    %216 = vector.extract_strided_slice %215 {offsets = [0, 0], sizes = [8, 128], strides = [1, 1]} : vector<8x512xf32> to vector<8x128xf32>
    %cst_74 = arith.constant 5.000000e-01 : f32
    %217 = vector.broadcast %cst_74 : f32 to vector<8x128xf32>
    %218 = arith.mulf %217, %216 : vector<8x128xf32>
    %219 = math.tanh %218 : vector<8x128xf32>
    %cst_75 = arith.constant 5.000000e-01 : f32
    %220 = vector.broadcast %cst_75 : f32 to vector<8x128xf32>
    %221 = arith.mulf %220, %219 : vector<8x128xf32>
    %cst_76 = arith.constant 5.000000e-01 : f32
    %222 = vector.broadcast %cst_76 : f32 to vector<8x128xf32>
    %223 = arith.addf %221, %222 : vector<8x128xf32>
    %224 = vector.extract_strided_slice %215 {offsets = [0, 128], sizes = [8, 128], strides = [1, 1]} : vector<8x512xf32> to vector<8x128xf32>
    %cst_77 = arith.constant 5.000000e-01 : f32
    %225 = vector.broadcast %cst_77 : f32 to vector<8x128xf32>
    %226 = arith.mulf %225, %224 : vector<8x128xf32>
    %227 = math.tanh %226 : vector<8x128xf32>
    %cst_78 = arith.constant 5.000000e-01 : f32
    %228 = vector.broadcast %cst_78 : f32 to vector<8x128xf32>
    %229 = arith.mulf %228, %227 : vector<8x128xf32>
    %cst_79 = arith.constant 5.000000e-01 : f32
    %230 = vector.broadcast %cst_79 : f32 to vector<8x128xf32>
    %231 = arith.addf %229, %230 : vector<8x128xf32>
    %232 = vector.extract_strided_slice %215 {offsets = [0, 256], sizes = [8, 128], strides = [1, 1]} : vector<8x512xf32> to vector<8x128xf32>
    %233 = math.tanh %232 : vector<8x128xf32>
    %234 = vector.extract_strided_slice %215 {offsets = [0, 384], sizes = [8, 128], strides = [1, 1]} : vector<8x512xf32> to vector<8x128xf32>
    %cst_80 = arith.constant 5.000000e-01 : f32
    %235 = vector.broadcast %cst_80 : f32 to vector<8x128xf32>
    %236 = arith.mulf %235, %234 : vector<8x128xf32>
    %237 = math.tanh %236 : vector<8x128xf32>
    %cst_81 = arith.constant 5.000000e-01 : f32
    %238 = vector.broadcast %cst_81 : f32 to vector<8x128xf32>
    %239 = arith.mulf %238, %237 : vector<8x128xf32>
    %cst_82 = arith.constant 5.000000e-01 : f32
    %240 = vector.broadcast %cst_82 : f32 to vector<8x128xf32>
    %241 = arith.addf %239, %240 : vector<8x128xf32>
    %242 = arith.mulf %231, %205 : vector<8x128xf32>
    %243 = arith.mulf %223, %233 : vector<8x128xf32>
    %244 = arith.addf %242, %243 : vector<8x128xf32>
    %245 = math.tanh %244 : vector<8x128xf32>
    %246 = arith.mulf %241, %245 : vector<8x128xf32>
    %c4_i32 = arith.constant 4 : i32
    %247 = arith.addi %6, %c4_i32 : i32
    %248 = vector.broadcast %247 : i32 to vector<8x1xi32>
    %249 = arith.cmpi sgt, %5, %248 : vector<8x1xi32>
    %250 = vector.shape_cast %249 : vector<8x1xi1> to vector<8x1xi1>
    %251 = vector.broadcast %250 : vector<8x1xi1> to vector<8x128xi1>
    %252 = arith.select %251, %246, %202 : vector<8x128xi1>, vector<8x128xf32>
    %253 = vector.shape_cast %249 : vector<8x1xi1> to vector<8x1xi1>
    %254 = vector.broadcast %253 : vector<8x1xi1> to vector<8x128xi1>
    %255 = arith.select %254, %244, %205 : vector<8x128xi1>, vector<8x128xf32>
    %c0_83 = arith.constant 0 : index
    %c4_84 = arith.constant 4 : index
    %c0_85 = arith.constant 0 : index
    %256 = vector.load %arg6[%c0_83, %c4_84, %c0_85] : memref<8x8x128xf32, #tpu.memory_space<vmem>>, vector<8x1x128xf32>
    %257 = vector.shape_cast %256 : vector<8x1x128xf32> to vector<8x128xf32>
    %258 = vector.shape_cast %252 : vector<8x128xf32> to vector<8x1x128xf32>
    tpu.vector_store %arg6[%c0_83, %c4_84, %c0_85], %258 {strides = array<i32>} : memref<8x8x128xf32, #tpu.memory_space<vmem>>, vector<8x1x128xf32>,
    %c5 = arith.constant 5 : index
    %c0_86 = arith.constant 0 : index
    %c0_87 = arith.constant 0 : index
    %259 = vector.load %arg2[%c5, %c0_86, %c0_87] : memref<8x8x128xbf16, #tpu.memory_space<vmem>>, vector<1x8x128xbf16>
    %260 = vector.shape_cast %259 : vector<1x8x128xbf16> to vector<8x128xbf16>
    %261 = arith.truncf %252 : vector<8x128xf32> to vector<8x128xbf16>
    %262 = tpu.concatenate %260, %261 in 1 : vector<8x128xbf16>, vector<8x128xbf16> -> vector<8x256xbf16>
    %cst_88 = arith.constant dense<0.000000e+00> : vector<8x512xf32>
    %263 = tpu.matmul %262, %3, %cst_88 {dimension_numbers = #tpu.dot_dimension_numbers<[1], [0], [0], [1], [0, 0, 1, 1], [], []>} : vector<8x256xbf16>, vector<256x512xbf16>, vector<8x512xf32> -> vector<8x512xf32>
    %264 = vector.broadcast %4 : vector<1x512xf32> to vector<8x512xf32>
    %265 = arith.addf %263, %264 : vector<8x512xf32>
    %266 = vector.extract_strided_slice %265 {offsets = [0, 0], sizes = [8, 128], strides = [1, 1]} : vector<8x512xf32> to vector<8x128xf32>
    %cst_89 = arith.constant 5.000000e-01 : f32
    %267 = vector.broadcast %cst_89 : f32 to vector<8x128xf32>
    %268 = arith.mulf %267, %266 : vector<8x128xf32>
    %269 = math.tanh %268 : vector<8x128xf32>
    %cst_90 = arith.constant 5.000000e-01 : f32
    %270 = vector.broadcast %cst_90 : f32 to vector<8x128xf32>
    %271 = arith.mulf %270, %269 : vector<8x128xf32>
    %cst_91 = arith.constant 5.000000e-01 : f32
    %272 = vector.broadcast %cst_91 : f32 to vector<8x128xf32>
    %273 = arith.addf %271, %272 : vector<8x128xf32>
    %274 = vector.extract_strided_slice %265 {offsets = [0, 128], sizes = [8, 128], strides = [1, 1]} : vector<8x512xf32> to vector<8x128xf32>
    %cst_92 = arith.constant 5.000000e-01 : f32
    %275 = vector.broadcast %cst_92 : f32 to vector<8x128xf32>
    %276 = arith.mulf %275, %274 : vector<8x128xf32>
    %277 = math.tanh %276 : vector<8x128xf32>
    %cst_93 = arith.constant 5.000000e-01 : f32
    %278 = vector.broadcast %cst_93 : f32 to vector<8x128xf32>
    %279 = arith.mulf %278, %277 : vector<8x128xf32>
    %cst_94 = arith.constant 5.000000e-01 : f32
    %280 = vector.broadcast %cst_94 : f32 to vector<8x128xf32>
    %281 = arith.addf %279, %280 : vector<8x128xf32>
    %282 = vector.extract_strided_slice %265 {offsets = [0, 256], sizes = [8, 128], strides = [1, 1]} : vector<8x512xf32> to vector<8x128xf32>
    %283 = math.tanh %282 : vector<8x128xf32>
    %284 = vector.extract_strided_slice %265 {offsets = [0, 384], sizes = [8, 128], strides = [1, 1]} : vector<8x512xf32> to vector<8x128xf32>
    %cst_95 = arith.constant 5.000000e-01 : f32
    %285 = vector.broadcast %cst_95 : f32 to vector<8x128xf32>
    %286 = arith.mulf %285, %284 : vector<8x128xf32>
    %287 = math.tanh %286 : vector<8x128xf32>
    %cst_96 = arith.constant 5.000000e-01 : f32
    %288 = vector.broadcast %cst_96 : f32 to vector<8x128xf32>
    %289 = arith.mulf %288, %287 : vector<8x128xf32>
    %cst_97 = arith.constant 5.000000e-01 : f32
    %290 = vector.broadcast %cst_97 : f32 to vector<8x128xf32>
    %291 = arith.addf %289, %290 : vector<8x128xf32>
    %292 = arith.mulf %281, %255 : vector<8x128xf32>
    %293 = arith.mulf %273, %283 : vector<8x128xf32>
    %294 = arith.addf %292, %293 : vector<8x128xf32>
    %295 = math.tanh %294 : vector<8x128xf32>
    %296 = arith.mulf %291, %295 : vector<8x128xf32>
    %c5_i32 = arith.constant 5 : i32
    %297 = arith.addi %6, %c5_i32 : i32
    %298 = vector.broadcast %297 : i32 to vector<8x1xi32>
    %299 = arith.cmpi sgt, %5, %298 : vector<8x1xi32>
    %300 = vector.shape_cast %299 : vector<8x1xi1> to vector<8x1xi1>
    %301 = vector.broadcast %300 : vector<8x1xi1> to vector<8x128xi1>
    %302 = arith.select %301, %296, %252 : vector<8x128xi1>, vector<8x128xf32>
    %303 = vector.shape_cast %299 : vector<8x1xi1> to vector<8x1xi1>
    %304 = vector.broadcast %303 : vector<8x1xi1> to vector<8x128xi1>
    %305 = arith.select %304, %294, %255 : vector<8x128xi1>, vector<8x128xf32>
    %c0_98 = arith.constant 0 : index
    %c5_99 = arith.constant 5 : index
    %c0_100 = arith.constant 0 : index
    %306 = vector.load %arg6[%c0_98, %c5_99, %c0_100] : memref<8x8x128xf32, #tpu.memory_space<vmem>>, vector<8x1x128xf32>
    %307 = vector.shape_cast %306 : vector<8x1x128xf32> to vector<8x128xf32>
    %308 = vector.shape_cast %302 : vector<8x128xf32> to vector<8x1x128xf32>
    tpu.vector_store %arg6[%c0_98, %c5_99, %c0_100], %308 {strides = array<i32>} : memref<8x8x128xf32, #tpu.memory_space<vmem>>, vector<8x1x128xf32>,
    %c6 = arith.constant 6 : index
    %c0_101 = arith.constant 0 : index
    %c0_102 = arith.constant 0 : index
    %309 = vector.load %arg2[%c6, %c0_101, %c0_102] : memref<8x8x128xbf16, #tpu.memory_space<vmem>>, vector<1x8x128xbf16>
    %310 = vector.shape_cast %309 : vector<1x8x128xbf16> to vector<8x128xbf16>
    %311 = arith.truncf %302 : vector<8x128xf32> to vector<8x128xbf16>
    %312 = tpu.concatenate %310, %311 in 1 : vector<8x128xbf16>, vector<8x128xbf16> -> vector<8x256xbf16>
    %cst_103 = arith.constant dense<0.000000e+00> : vector<8x512xf32>
    %313 = tpu.matmul %312, %3, %cst_103 {dimension_numbers = #tpu.dot_dimension_numbers<[1], [0], [0], [1], [0, 0, 1, 1], [], []>} : vector<8x256xbf16>, vector<256x512xbf16>, vector<8x512xf32> -> vector<8x512xf32>
    %314 = vector.broadcast %4 : vector<1x512xf32> to vector<8x512xf32>
    %315 = arith.addf %313, %314 : vector<8x512xf32>
    %316 = vector.extract_strided_slice %315 {offsets = [0, 0], sizes = [8, 128], strides = [1, 1]} : vector<8x512xf32> to vector<8x128xf32>
    %cst_104 = arith.constant 5.000000e-01 : f32
    %317 = vector.broadcast %cst_104 : f32 to vector<8x128xf32>
    %318 = arith.mulf %317, %316 : vector<8x128xf32>
    %319 = math.tanh %318 : vector<8x128xf32>
    %cst_105 = arith.constant 5.000000e-01 : f32
    %320 = vector.broadcast %cst_105 : f32 to vector<8x128xf32>
    %321 = arith.mulf %320, %319 : vector<8x128xf32>
    %cst_106 = arith.constant 5.000000e-01 : f32
    %322 = vector.broadcast %cst_106 : f32 to vector<8x128xf32>
    %323 = arith.addf %321, %322 : vector<8x128xf32>
    %324 = vector.extract_strided_slice %315 {offsets = [0, 128], sizes = [8, 128], strides = [1, 1]} : vector<8x512xf32> to vector<8x128xf32>
    %cst_107 = arith.constant 5.000000e-01 : f32
    %325 = vector.broadcast %cst_107 : f32 to vector<8x128xf32>
    %326 = arith.mulf %325, %324 : vector<8x128xf32>
    %327 = math.tanh %326 : vector<8x128xf32>
    %cst_108 = arith.constant 5.000000e-01 : f32
    %328 = vector.broadcast %cst_108 : f32 to vector<8x128xf32>
    %329 = arith.mulf %328, %327 : vector<8x128xf32>
    %cst_109 = arith.constant 5.000000e-01 : f32
    %330 = vector.broadcast %cst_109 : f32 to vector<8x128xf32>
    %331 = arith.addf %329, %330 : vector<8x128xf32>
    %332 = vector.extract_strided_slice %315 {offsets = [0, 256], sizes = [8, 128], strides = [1, 1]} : vector<8x512xf32> to vector<8x128xf32>
    %333 = math.tanh %332 : vector<8x128xf32>
    %334 = vector.extract_strided_slice %315 {offsets = [0, 384], sizes = [8, 128], strides = [1, 1]} : vector<8x512xf32> to vector<8x128xf32>
    %cst_110 = arith.constant 5.000000e-01 : f32
    %335 = vector.broadcast %cst_110 : f32 to vector<8x128xf32>
    %336 = arith.mulf %335, %334 : vector<8x128xf32>
    %337 = math.tanh %336 : vector<8x128xf32>
    %cst_111 = arith.constant 5.000000e-01 : f32
    %338 = vector.broadcast %cst_111 : f32 to vector<8x128xf32>
    %339 = arith.mulf %338, %337 : vector<8x128xf32>
    %cst_112 = arith.constant 5.000000e-01 : f32
    %340 = vector.broadcast %cst_112 : f32 to vector<8x128xf32>
    %341 = arith.addf %339, %340 : vector<8x128xf32>
    %342 = arith.mulf %331, %305 : vector<8x128xf32>
    %343 = arith.mulf %323, %333 : vector<8x128xf32>
    %344 = arith.addf %342, %343 : vector<8x128xf32>
    %345 = math.tanh %344 : vector<8x128xf32>
    %346 = arith.mulf %341, %345 : vector<8x128xf32>
    %c6_i32 = arith.constant 6 : i32
    %347 = arith.addi %6, %c6_i32 : i32
    %348 = vector.broadcast %347 : i32 to vector<8x1xi32>
    %349 = arith.cmpi sgt, %5, %348 : vector<8x1xi32>
    %350 = vector.shape_cast %349 : vector<8x1xi1> to vector<8x1xi1>
    %351 = vector.broadcast %350 : vector<8x1xi1> to vector<8x128xi1>
    %352 = arith.select %351, %346, %302 : vector<8x128xi1>, vector<8x128xf32>
    %353 = vector.shape_cast %349 : vector<8x1xi1> to vector<8x1xi1>
    %354 = vector.broadcast %353 : vector<8x1xi1> to vector<8x128xi1>
    %355 = arith.select %354, %344, %305 : vector<8x128xi1>, vector<8x128xf32>
    %c0_113 = arith.constant 0 : index
    %c6_114 = arith.constant 6 : index
    %c0_115 = arith.constant 0 : index
    %356 = vector.load %arg6[%c0_113, %c6_114, %c0_115] : memref<8x8x128xf32, #tpu.memory_space<vmem>>, vector<8x1x128xf32>
    %357 = vector.shape_cast %356 : vector<8x1x128xf32> to vector<8x128xf32>
    %358 = vector.shape_cast %352 : vector<8x128xf32> to vector<8x1x128xf32>
    tpu.vector_store %arg6[%c0_113, %c6_114, %c0_115], %358 {strides = array<i32>} : memref<8x8x128xf32, #tpu.memory_space<vmem>>, vector<8x1x128xf32>,
    %c7 = arith.constant 7 : index
    %c0_116 = arith.constant 0 : index
    %c0_117 = arith.constant 0 : index
    %359 = vector.load %arg2[%c7, %c0_116, %c0_117] : memref<8x8x128xbf16, #tpu.memory_space<vmem>>, vector<1x8x128xbf16>
    %360 = vector.shape_cast %359 : vector<1x8x128xbf16> to vector<8x128xbf16>
    %361 = arith.truncf %352 : vector<8x128xf32> to vector<8x128xbf16>
    %362 = tpu.concatenate %360, %361 in 1 : vector<8x128xbf16>, vector<8x128xbf16> -> vector<8x256xbf16>
    %cst_118 = arith.constant dense<0.000000e+00> : vector<8x512xf32>
    %363 = tpu.matmul %362, %3, %cst_118 {dimension_numbers = #tpu.dot_dimension_numbers<[1], [0], [0], [1], [0, 0, 1, 1], [], []>} : vector<8x256xbf16>, vector<256x512xbf16>, vector<8x512xf32> -> vector<8x512xf32>
    %364 = vector.broadcast %4 : vector<1x512xf32> to vector<8x512xf32>
    %365 = arith.addf %363, %364 : vector<8x512xf32>
    %366 = vector.extract_strided_slice %365 {offsets = [0, 0], sizes = [8, 128], strides = [1, 1]} : vector<8x512xf32> to vector<8x128xf32>
    %cst_119 = arith.constant 5.000000e-01 : f32
    %367 = vector.broadcast %cst_119 : f32 to vector<8x128xf32>
    %368 = arith.mulf %367, %366 : vector<8x128xf32>
    %369 = math.tanh %368 : vector<8x128xf32>
    %cst_120 = arith.constant 5.000000e-01 : f32
    %370 = vector.broadcast %cst_120 : f32 to vector<8x128xf32>
    %371 = arith.mulf %370, %369 : vector<8x128xf32>
    %cst_121 = arith.constant 5.000000e-01 : f32
    %372 = vector.broadcast %cst_121 : f32 to vector<8x128xf32>
    %373 = arith.addf %371, %372 : vector<8x128xf32>
    %374 = vector.extract_strided_slice %365 {offsets = [0, 128], sizes = [8, 128], strides = [1, 1]} : vector<8x512xf32> to vector<8x128xf32>
    %cst_122 = arith.constant 5.000000e-01 : f32
    %375 = vector.broadcast %cst_122 : f32 to vector<8x128xf32>
    %376 = arith.mulf %375, %374 : vector<8x128xf32>
    %377 = math.tanh %376 : vector<8x128xf32>
    %cst_123 = arith.constant 5.000000e-01 : f32
    %378 = vector.broadcast %cst_123 : f32 to vector<8x128xf32>
    %379 = arith.mulf %378, %377 : vector<8x128xf32>
    %cst_124 = arith.constant 5.000000e-01 : f32
    %380 = vector.broadcast %cst_124 : f32 to vector<8x128xf32>
    %381 = arith.addf %379, %380 : vector<8x128xf32>
    %382 = vector.extract_strided_slice %365 {offsets = [0, 256], sizes = [8, 128], strides = [1, 1]} : vector<8x512xf32> to vector<8x128xf32>
    %383 = math.tanh %382 : vector<8x128xf32>
    %384 = vector.extract_strided_slice %365 {offsets = [0, 384], sizes = [8, 128], strides = [1, 1]} : vector<8x512xf32> to vector<8x128xf32>
    %cst_125 = arith.constant 5.000000e-01 : f32
    %385 = vector.broadcast %cst_125 : f32 to vector<8x128xf32>
    %386 = arith.mulf %385, %384 : vector<8x128xf32>
    %387 = math.tanh %386 : vector<8x128xf32>
    %cst_126 = arith.constant 5.000000e-01 : f32
    %388 = vector.broadcast %cst_126 : f32 to vector<8x128xf32>
    %389 = arith.mulf %388, %387 : vector<8x128xf32>
    %cst_127 = arith.constant 5.000000e-01 : f32
    %390 = vector.broadcast %cst_127 : f32 to vector<8x128xf32>
    %391 = arith.addf %389, %390 : vector<8x128xf32>
    %392 = arith.mulf %381, %355 : vector<8x128xf32>
    %393 = arith.mulf %373, %383 : vector<8x128xf32>
    %394 = arith.addf %392, %393 : vector<8x128xf32>
    %395 = math.tanh %394 : vector<8x128xf32>
    %396 = arith.mulf %391, %395 : vector<8x128xf32>
    %c7_i32 = arith.constant 7 : i32
    %397 = arith.addi %6, %c7_i32 : i32
    %398 = vector.broadcast %397 : i32 to vector<8x1xi32>
    %399 = arith.cmpi sgt, %5, %398 : vector<8x1xi32>
    %400 = vector.shape_cast %399 : vector<8x1xi1> to vector<8x1xi1>
    %401 = vector.broadcast %400 : vector<8x1xi1> to vector<8x128xi1>
    %402 = arith.select %401, %396, %352 : vector<8x128xi1>, vector<8x128xf32>
    %403 = vector.shape_cast %399 : vector<8x1xi1> to vector<8x1xi1>
    %404 = vector.broadcast %403 : vector<8x1xi1> to vector<8x128xi1>
    %405 = arith.select %404, %394, %355 : vector<8x128xi1>, vector<8x128xf32>
    %c0_128 = arith.constant 0 : index
    %c7_129 = arith.constant 7 : index
    %c0_130 = arith.constant 0 : index
    %406 = vector.load %arg6[%c0_128, %c7_129, %c0_130] : memref<8x8x128xf32, #tpu.memory_space<vmem>>, vector<8x1x128xf32>
    %407 = vector.shape_cast %406 : vector<8x1x128xf32> to vector<8x128xf32>
    %408 = vector.shape_cast %402 : vector<8x128xf32> to vector<8x1x128xf32>
    tpu.vector_store %arg6[%c0_128, %c7_129, %c0_130], %408 {strides = array<i32>} : memref<8x8x128xf32, #tpu.memory_space<vmem>>, vector<8x1x128xf32>,
    %c0_131 = arith.constant 0 : index
    %c0_132 = arith.constant 0 : index
    %409 = vector.load %arg9[%c0_131, %c0_132] : memref<8x128xf32, #tpu.memory_space<vmem>>, vector<8x128xf32>
    tpu.vector_store %arg9[%c0_131, %c0_132], %402 {strides = array<i32>} : memref<8x128xf32, #tpu.memory_space<vmem>>, vector<8x128xf32>,
    %c0_133 = arith.constant 0 : index
    %c0_134 = arith.constant 0 : index
    %410 = vector.load %arg10[%c0_133, %c0_134] : memref<8x128xf32, #tpu.memory_space<vmem>>, vector<8x128xf32>
    tpu.vector_store %arg10[%c0_133, %c0_134], %405 {strides = array<i32>} : memref<8x128xf32, #tpu.memory_space<vmem>>, vector<8x128xf32>,
    %c0_i32_135 = arith.constant 0 : i32
    %411 = arith.cmpi eq, %arg1, %c0_i32_135 : i32
    %412 = arith.extui %411 : i1 to i32
    %c0_i32_136 = arith.constant 0 : i32
    %413 = arith.cmpi ne, %412, %c0_i32_136 : i32
    scf.if %413 {
      %c0_137 = arith.constant 0 : index
      %c0_138 = arith.constant 0 : index
      %414 = vector.load %arg7[%c0_137, %c0_138] : memref<8x128xf32, #tpu.memory_space<vmem>>, vector<8x128xf32>
      tpu.vector_store %arg7[%c0_137, %c0_138], %402 {strides = array<i32>} : memref<8x128xf32, #tpu.memory_space<vmem>>, vector<8x128xf32>,
      %c0_139 = arith.constant 0 : index
      %c0_140 = arith.constant 0 : index
      %415 = vector.load %arg8[%c0_139, %c0_140] : memref<8x128xf32, #tpu.memory_space<vmem>>, vector<8x128xf32>
      tpu.vector_store %arg8[%c0_139, %c0_140], %405 {strides = array<i32>} : memref<8x128xf32, #tpu.memory_space<vmem>>, vector<8x128xf32>,
    } else {
    }
    return
  }
  func.func @transform_0(%arg0: i32, %arg1: i32) -> (i32, i32, i32) {
    %c0_i32 = arith.constant 0 : i32
    %c0_i32_0 = arith.constant 0 : i32
    return %arg1, %arg0, %c0_i32 : i32, i32, i32
  }
  func.func @transform_1(%arg0: i32, %arg1: i32) -> (i32, i32) {
    %c0_i32 = arith.constant 0 : i32
    %c0_i32_0 = arith.constant 0 : i32
    return %arg0, %c0_i32 : i32, i32
  }
  func.func @transform_2(%arg0: i32, %arg1: i32) -> (i32, i32) {
    %c0_i32 = arith.constant 0 : i32
    %c0_i32_0 = arith.constant 0 : i32
    %c0_i32_1 = arith.constant 0 : i32
    return %c0_i32, %c0_i32_0 : i32, i32
  }
  func.func @transform_3(%arg0: i32, %arg1: i32) -> (i32, i32) {
    %c0_i32 = arith.constant 0 : i32
    %c0_i32_0 = arith.constant 0 : i32
    %c0_i32_1 = arith.constant 0 : i32
    return %c0_i32, %c0_i32_0 : i32, i32
  }
  func.func @transform_4(%arg0: i32, %arg1: i32) -> (i32, i32, i32) {
    %c0_i32 = arith.constant 0 : i32
    %c0_i32_0 = arith.constant 0 : i32
    return %arg0, %arg1, %c0_i32 : i32, i32, i32
  }
  func.func @transform_5(%arg0: i32, %arg1: i32) -> (i32, i32) {
    %c0_i32 = arith.constant 0 : i32
    %c0_i32_0 = arith.constant 0 : i32
    return %arg0, %c0_i32 : i32, i32
  }
  func.func @transform_6(%arg0: i32, %arg1: i32) -> (i32, i32) {
    %c0_i32 = arith.constant 0 : i32
    %c0_i32_0 = arith.constant 0 : i32
    return %arg0, %c0_i32 : i32, i32
  }
}

</mosaic_0001>

<llo_original>
// kernel: tpu_custom_call.1
$region0: #{tpu_custom_call.1}
  #allocation0 [shape = 'u32[]', space=smem, size = 0x4, offset = 0x4, fixed_abs, tag = 'smem constant byte address 0x4 - core index']
  #allocation1 [shape = 'u32[144,128]{1,0:T(1,128)}', space=vmem, size = 0x12000, scoped, tag = 'internal scratch']
  #allocation2 [shape = 'f32[8,128]{1,0:T(8,128)}', space=vmem, size = 0x1000, scoped, tag = 'scratch operand']
  #allocation3 [shape = 'f32[8,128]{1,0:T(8,128)}', space=vmem, size = 0x1000, scoped, tag = 'scratch operand']
  %s0 = inlined_call_operand.hbm [shape: bf16[8,8,128], index: 0, kind: input, shape index: {}]
  %s1 = inlined_call_operand.vmem [shape: s32[8,1], index: 1, kind: input, shape index: {}]
  %s2 = inlined_call_operand.hbm [shape: bf16[256,512], index: 2, kind: input, shape index: {}]
  %s3 = inlined_call_operand.vmem [shape: f32[1,512], index: 3, kind: input, shape index: {}]
  %s4 = inlined_call_operand.hbm [shape: f32[8,8,128], index: 4, kind: output, shape index: {0}]
  %s5 = inlined_call_operand.hbm [shape: f32[8,128], index: 5, kind: output, shape index: {1}]
  %s6 = inlined_call_operand.hbm [shape: f32[8,128], index: 6, kind: output, shape index: {2}]
  %7 = xla_tuple %s4, %s5, %s6
  %s8 = sld [smem:[#allocation0]]
  $region58: #{tpu_custom_call.1} parent=0
    _
  %s10 = ssub.s32 1, %s8
  %s11 = scalar_select 0, %s10, %s8
  $region1: #{tpu_custom_call.1} parent=0
    #allocation4 [shape = 'u8[16384]{0}', space=vmem, size = 0x4000, scoped, tag = 'input window, operand 0, single buffered']
    #allocation5 [shape = 's32[1]{0}', space=sflag, size = 0x4, scoped, tag = 'scoped memory for tpu_custom_call.1']
    #allocation6 [shape = 's32[1]{0}', space=sflag, size = 0x4, scoped, tag = 'scoped memory for tpu_custom_call.1']
    #allocation7 [shape = 'u8[262144]{0}', space=vmem, size = 0x40000, scoped, tag = 'input window, operand 2, single buffered']
    #allocation8 [shape = 's32[1]{0}', space=sflag, size = 0x4, scoped, tag = 'scoped memory for tpu_custom_call.1']
    #allocation9 [shape = 'u8[32768]{0}', space=vmem, size = 0x8000, scoped, tag = 'output window, operand 0, single buffered']
    #allocation10 [shape = 'u8[4096]{0}', space=vmem, size = 0x1000, scoped, tag = 'output window, operand 1, single buffered']
    #allocation11 [shape = 's32[1]{0}', space=sflag, size = 0x4, scoped, tag = 'scoped memory for tpu_custom_call.1']
    #allocation12 [shape = 'u8[4096]{0}', space=vmem, size = 0x1000, scoped, tag = 'output window, operand 2, single buffered']
    %12 = vsyncpa [#allocation5], 0
    %13 = vsyncpa [#allocation8], 0
    %14 = vsyncpa [#allocation6], 0
    %15 = vsyncpa [#allocation11], 0
    // Predicated region
    $region2: #{tpu_custom_call.1} parent=1 // pred_check
      _
    $region3: #{tpu_custom_call.1} parent=1 // pred_check_branch
      %17 = sbr.rel (0) target = $region5
    $region4: #{tpu_custom_call.1} parent=1 // pred_region
      %s19 = ssub.s32 512, 512
      %20 = vsyncadd [#allocation5], %s19
      %s21 = sshll.u32 [#allocation4], 4
      %s22 = int_to_ptr.vmem [resolvable:$true] %s21
      %27 = dma.hbm_to_vmem [thread:$0]  %s0, 512, %s22, [#allocation5], 64, 64, 4
    $region5: #{tpu_custom_call.1} parent=1 // pred_fallthru
      _
    // Predicated region
    $region6: #{tpu_custom_call.1} parent=1 // pred_check
      _
    $region7: #{tpu_custom_call.1} parent=1 // pred_check_branch
      %29 = sbr.rel (0) target = $region9
    $region8: #{tpu_custom_call.1} parent=1 // pred_region
      _
    $region9: #{tpu_custom_call.1} parent=1 // pred_fallthru
      _
    // Predicated region
    $region10: #{tpu_custom_call.1} parent=1 // pred_check
      _
    $region11: #{tpu_custom_call.1} parent=1 // pred_check_branch
      %31 = sbr.rel (0) target = $region13
    $region12: #{tpu_custom_call.1} parent=1 // pred_region
      %s33 = ssub.s32 8192, 8192
      %34 = vsyncadd [#allocation8], %s33
      %s35 = sshll.u32 [#allocation7], 4
      %s36 = int_to_ptr.vmem [resolvable:$true] %s35
      %41 = dma.hbm_to_vmem [thread:$0]  %s2, 8192, %s36, [#allocation8], 256, 256, 16
    $region13: #{tpu_custom_call.1} parent=1 // pred_fallthru
      _
    // Predicated region
    $region14: #{tpu_custom_call.1} parent=1 // pred_check
      _
    $region15: #{tpu_custom_call.1} parent=1 // pred_check_branch
      %43 = sbr.rel (0) target = $region17
    $region16: #{tpu_custom_call.1} parent=1 // pred_region
      _
    $region17: #{tpu_custom_call.1} parent=1 // pred_fallthru
      _
    // Predicated region
    $region18: #{tpu_custom_call.1} parent=1 // pred_check
      _
    $region19: #{tpu_custom_call.1} parent=1 // pred_check_branch
      %45 = sbr.rel (0) target = $region21
    $region20: #{tpu_custom_call.1} parent=1 // pred_region
      %46 = dma.done [#allocation5], 512
    $region21: #{tpu_custom_call.1} parent=1 // pred_fallthru
      _
    // Predicated region
    $region22: #{tpu_custom_call.1} parent=1 // pred_check
      _
    $region23: #{tpu_custom_call.1} parent=1 // pred_check_branch
      %48 = sbr.rel (0) target = $region25
    $region24: #{tpu_custom_call.1} parent=1 // pred_region
      %49 = dma.done [#allocation8], 8192
    $region25: #{tpu_custom_call.1} parent=1 // pred_fallthru
      _
    %p50 = scmp.eq.s32.totalorder 0, 0
    // Predicated region
    $region26: #{tpu_custom_call.1} parent=1 // pred_check
      %p51 = pneg %p50
    $region27: #{tpu_custom_call.1} parent=1 // pred_check_branch
      %53 = sbr.rel (%p51) target = $region29
    $region28: #{tpu_custom_call.1} parent=1 // pred_region
      %54 = vst [vmem:[#allocation2] sm:$0xff] 0.0
      %55 = vst [vmem:[#allocation3] sm:$0xff] 0.0
    $region29: #{tpu_custom_call.1} parent=1 // pred_fallthru
      _
    %v56 = vld [vmem:[#allocation7] sm:$0xff]
    %v57 = vld [vmem:[#allocation7 + $0x8] sm:$0xff]
    %v58 = vld [vmem:[#allocation7 + $0x10] sm:$0xff]
    %v59 = vld [vmem:[#allocation7 + $0x18] sm:$0xff]
    %v60 = vld [vmem:[#allocation7 + $0x20] sm:$0xff]
    %v61 = vld [vmem:[#allocation7 + $0x28] sm:$0xff]
    %v62 = vld [vmem:[#allocation7 + $0x30] sm:$0xff]
    %v63 = vld [vmem:[#allocation7 + $0x38] sm:$0xff]
    %v64 = vld [vmem:[#allocation7 + $0x40] sm:$0xff]
    %v65 = vld [vmem:[#allocation7 + $0x48] sm:$0xff]
    %v66 = vld [vmem:[#allocation7 + $0x50] sm:$0xff]
    %v67 = vld [vmem:[#allocation7 + $0x58] sm:$0xff]
    %v68 = vld [vmem:[#allocation7 + $0x60] sm:$0xff]
    %v69 = vld [vmem:[#allocation7 + $0x68] sm:$0xff]
    %v70 = vld [vmem:[#allocation7 + $0x70] sm:$0xff]
    %v71 = vld [vmem:[#allocation7 + $0x78] sm:$0xff]
    %v72 = vld [vmem:[#allocation7 + $0x80] sm:$0xff]
    %v73 = vld [vmem:[#allocation7 + $0x88] sm:$0xff]
    %v74 = vld [vmem:[#allocation7 + $0x90] sm:$0xff]
    %v75 = vld [vmem:[#allocation7 + $0x98] sm:$0xff]
    %v76 = vld [vmem:[#allocation7 + $0xa0] sm:$0xff]
    %v77 = vld [vmem:[#allocation7 + $0xa8] sm:$0xff]
    %v78 = vld [vmem:[#allocation7 + $0xb0] sm:$0xff]
    %v79 = vld [vmem:[#allocation7 + $0xb8] sm:$0xff]
    %v80 = vld [vmem:[#allocation7 + $0xc0] sm:$0xff]
    %v81 = vld [vmem:[#allocation7 + $0xc8] sm:$0xff]
    %v82 = vld [vmem:[#allocation7 + $0xd0] sm:$0xff]
    %v83 = vld [vmem:[#allocation7 + $0xd8] sm:$0xff]
    %v84 = vld [vmem:[#allocation7 + $0xe0] sm:$0xff]
    %v85 = vld [vmem:[#allocation7 + $0xe8] sm:$0xff]
    %v86 = vld [vmem:[#allocation7 + $0xf0] sm:$0xff]
    %v87 = vld [vmem:[#allocation7 + $0xf8] sm:$0xff]
    %v88 = vld [vmem:[#allocation7 + $0x100] sm:$0xff]
    %v89 = vld [vmem:[#allocation7 + $0x108] sm:$0xff]
    %v90 = vld [vmem:[#allocation7 + $0x110] sm:$0xff]
    %v91 = vld [vmem:[#allocation7 + $0x118] sm:$0xff]
    %v92 = vld [vmem:[#allocation7 + $0x120] sm:$0xff]
    %v93 = vld [vmem:[#allocation7 + $0x128] sm:$0xff]
    %v94 = vld [vmem:[#allocation7 + $0x130] sm:$0xff]
    %v95 = vld [vmem:[#allocation7 + $0x138] sm:$0xff]
    %v96 = vld [vmem:[#allocation7 + $0x140] sm:$0xff]
    %v97 = vld [vmem:[#allocation7 + $0x148] sm:$0xff]
    %v98 = vld [vmem:[#allocation7 + $0x150] sm:$0xff]
    %v99 = vld [vmem:[#allocation7 + $0x158] sm:$0xff]
    %v100 = vld [vmem:[#allocation7 + $0x160] sm:$0xff]
    %v101 = vld [vmem:[#allocation7 + $0x168] sm:$0xff]
    %v102 = vld [vmem:[#allocation7 + $0x170] sm:$0xff]
    %v103 = vld [vmem:[#allocation7 + $0x178] sm:$0xff]
    %v104 = vld [vmem:[#allocation7 + $0x180] sm:$0xff]
    %v105 = vld [vmem:[#allocation7 + $0x188] sm:$0xff]
    %v106 = vld [vmem:[#allocation7 + $0x190] sm:$0xff]
    %v107 = vld [vmem:[#allocation7 + $0x198] sm:$0xff]
    %v108 = vld [vmem:[#allocation7 + $0x1a0] sm:$0xff]
    %v109 = vld [vmem:[#allocation7 + $0x1a8] sm:$0xff]
    %v110 = vld [vmem:[#allocation7 + $0x1b0] sm:$0xff]
    %v111 = vld [vmem:[#allocation7 + $0x1b8] sm:$0xff]
    %v112 = vld [vmem:[#allocation7 + $0x1c0] sm:$0xff]
    %v113 = vld [vmem:[#allocation7 + $0x1c8] sm:$0xff]
    %v114 = vld [vmem:[#allocation7 + $0x1d0] sm:$0xff]
    %v115 = vld [vmem:[#allocation7 + $0x1d8] sm:$0xff]
    %v116 = vld [vmem:[#allocation7 + $0x1e0] sm:$0xff]
    %v117 = vld [vmem:[#allocation7 + $0x1e8] sm:$0xff]
    %v118 = vld [vmem:[#allocation7 + $0x1f0] sm:$0xff]
    %v119 = vld [vmem:[#allocation7 + $0x1f8] sm:$0xff]
    %v120 = vld [vmem:[%s3] sm:$0xf]
    %v121 = vld [vmem:[%s1] sm:$0xff]
    %s122 = smul.u32 0, 8
    %v123 = vld [vmem:[#allocation2] sm:$0xff]
    %v124 = vld [vmem:[#allocation3] sm:$0xff]
    %v125 = vld [vmem:[#allocation4] sm:$0xf]
    %v126 = vpack.c.bf16 %v123, %v123
    %v128 = vlaneseq
    %v129 = vshrl.u32 %v128, 7
    %v130 = vsub.s32 0, %v129
    %v131 = vrot.slane %v120, %v130
    %v132 = vlaneseq
    %v133 = vshrl.u32 %v132, 7
    %v134 = vsub.s32 1, %v133
    %v135 = vrot.slane %v120, %v134
    %v136 = vlaneseq
    %v137 = vshrl.u32 %v136, 7
    %v138 = vsub.s32 2, %v137
    %v139 = vrot.slane %v120, %v138
    %v140 = vlaneseq
    %v141 = vshrl.u32 %v140, 7
    %v142 = vsub.s32 3, %v141
    %v143 = vrot.slane %v120, %v142
    %v212 = vunpack.c.l.b16 %v56
    %v213 = vunpack.c.h.b16 %v56
    %v214 = vunpack.c.l.b16 %v57
    %v215 = vunpack.c.h.b16 %v57
    %v216 = vunpack.c.l.b16 %v58
    %v217 = vunpack.c.h.b16 %v58
    %v218 = vunpack.c.l.b16 %v59
    %v219 = vunpack.c.h.b16 %v59
    %v220 = vunpack.c.l.b16 %v60
    %v221 = vunpack.c.h.b16 %v60
    %v222 = vunpack.c.l.b16 %v61
    %v223 = vunpack.c.h.b16 %v61
    %v224 = vunpack.c.l.b16 %v62
    %v225 = vunpack.c.h.b16 %v62
    %v226 = vunpack.c.l.b16 %v63
    %v227 = vunpack.c.h.b16 %v63
    %v228 = vunpack.c.l.b16 %v64
    %v229 = vunpack.c.h.b16 %v64
    %v230 = vunpack.c.l.b16 %v65
    %v231 = vunpack.c.h.b16 %v65
    %v232 = vunpack.c.l.b16 %v66
    %v233 = vunpack.c.h.b16 %v66
    %v234 = vunpack.c.l.b16 %v67
    %v235 = vunpack.c.h.b16 %v67
    %v236 = vunpack.c.l.b16 %v68
    %v237 = vunpack.c.h.b16 %v68
    %v238 = vunpack.c.l.b16 %v69
    %v239 = vunpack.c.h.b16 %v69
    %v240 = vunpack.c.l.b16 %v70
    %v241 = vunpack.c.h.b16 %v70
    %v242 = vunpack.c.l.b16 %v71
    %v243 = vunpack.c.h.b16 %v71
    %v244 = vunpack.c.l.b16 %v72
    %v245 = vunpack.c.h.b16 %v72
    %v246 = vunpack.c.l.b16 %v73
    %v247 = vunpack.c.h.b16 %v73
    %v248 = vunpack.c.l.b16 %v74
    %v249 = vunpack.c.h.b16 %v74
    %v250 = vunpack.c.l.b16 %v75
    %v251 = vunpack.c.h.b16 %v75
    %v252 = vunpack.c.l.b16 %v76
    %v253 = vunpack.c.h.b16 %v76
    %v254 = vunpack.c.l.b16 %v77
    %v255 = vunpack.c.h.b16 %v77
    %v256 = vunpack.c.l.b16 %v78
    %v257 = vunpack.c.h.b16 %v78
    %v258 = vunpack.c.l.b16 %v79
    %v259 = vunpack.c.h.b16 %v79
    %v260 = vunpack.c.l.b16 %v80
    %v261 = vunpack.c.h.b16 %v80
    %v262 = vunpack.c.l.b16 %v81
    %v263 = vunpack.c.h.b16 %v81
    %v264 = vunpack.c.l.b16 %v82
    %v265 = vunpack.c.h.b16 %v82
    %v266 = vunpack.c.l.b16 %v83
    %v267 = vunpack.c.h.b16 %v83
    %v268 = vunpack.c.l.b16 %v84
    %v269 = vunpack.c.h.b16 %v84
    %v270 = vunpack.c.l.b16 %v85
    %v271 = vunpack.c.h.b16 %v85
    %v272 = vunpack.c.l.b16 %v86
    %v273 = vunpack.c.h.b16 %v86
    %v274 = vunpack.c.l.b16 %v87
    %v275 = vunpack.c.h.b16 %v87
    %v276 = vunpack.c.l.b16 %v88
    %v277 = vunpack.c.h.b16 %v88
    %v278 = vunpack.c.l.b16 %v89
    %v279 = vunpack.c.h.b16 %v89
    %v280 = vunpack.c.l.b16 %v90
    %v281 = vunpack.c.h.b16 %v90
    %v282 = vunpack.c.l.b16 %v91
    %v283 = vunpack.c.h.b16 %v91
    %v284 = vunpack.c.l.b16 %v92
    %v285 = vunpack.c.h.b16 %v92
    %v286 = vunpack.c.l.b16 %v93
    %v287 = vunpack.c.h.b16 %v93
    %v288 = vunpack.c.l.b16 %v94
    %v289 = vunpack.c.h.b16 %v94
    %v290 = vunpack.c.l.b16 %v95
    %v291 = vunpack.c.h.b16 %v95
    %v292 = vunpack.c.l.b16 %v96
    %v293 = vunpack.c.h.b16 %v96
    %v294 = vunpack.c.l.b16 %v97
    %v295 = vunpack.c.h.b16 %v97
    %v296 = vunpack.c.l.b16 %v98
    %v297 = vunpack.c.h.b16 %v98
    %v298 = vunpack.c.l.b16 %v99
    %v299 = vunpack.c.h.b16 %v99
    %v300 = vunpack.c.l.b16 %v100
    %v301 = vunpack.c.h.b16 %v100
    %v302 = vunpack.c.l.b16 %v101
    %v303 = vunpack.c.h.b16 %v101
    %v304 = vunpack.c.l.b16 %v102
    %v305 = vunpack.c.h.b16 %v102
    %v306 = vunpack.c.l.b16 %v103
    %v307 = vunpack.c.h.b16 %v103
    %v308 = vunpack.c.l.b16 %v104
    %v309 = vunpack.c.h.b16 %v104
    %v310 = vunpack.c.l.b16 %v105
    %v311 = vunpack.c.h.b16 %v105
    %v312 = vunpack.c.l.b16 %v106
    %v313 = vunpack.c.h.b16 %v106
    %v314 = vunpack.c.l.b16 %v107
    %v315 = vunpack.c.h.b16 %v107
    %v316 = vunpack.c.l.b16 %v108
    %v317 = vunpack.c.h.b16 %v108
    %v318 = vunpack.c.l.b16 %v109
    %v319 = vunpack.c.h.b16 %v109
    %v320 = vunpack.c.l.b16 %v110
    %v321 = vunpack.c.h.b16 %v110
    %v322 = vunpack.c.l.b16 %v111
    %v323 = vunpack.c.h.b16 %v111
    %v324 = vunpack.c.l.b16 %v112
    %v325 = vunpack.c.h.b16 %v112
    %v326 = vunpack.c.l.b16 %v113
    %v327 = vunpack.c.h.b16 %v113
    %v328 = vunpack.c.l.b16 %v114
    %v329 = vunpack.c.h.b16 %v114
    %v330 = vunpack.c.l.b16 %v115
    %v331 = vunpack.c.h.b16 %v115
    %v332 = vunpack.c.l.b16 %v116
    %v333 = vunpack.c.h.b16 %v116
    %v334 = vunpack.c.l.b16 %v117
    %v335 = vunpack.c.h.b16 %v117
    %v336 = vunpack.c.l.b16 %v118
    %v337 = vunpack.c.h.b16 %v118
    %v338 = vunpack.c.l.b16 %v119
    %v339 = vunpack.c.h.b16 %v119
    %v340 = vpack.c.b16 %v216, %v212
    %v341 = vpack.c.b16 %v217, %v213
    %v342 = vpack.c.b16 %v218, %v214
    %v343 = vpack.c.b16 %v219, %v215
    %v344 = vpack.c.b16 %v224, %v220
    %v345 = vpack.c.b16 %v225, %v221
    %v346 = vpack.c.b16 %v226, %v222
    %v347 = vpack.c.b16 %v227, %v223
    %v348 = vpack.c.b16 %v232, %v228
    %v349 = vpack.c.b16 %v233, %v229
    %v350 = vpack.c.b16 %v234, %v230
    %v351 = vpack.c.b16 %v235, %v231
    %v352 = vpack.c.b16 %v240, %v236
    %v353 = vpack.c.b16 %v241, %v237
    %v354 = vpack.c.b16 %v242, %v238
    %v355 = vpack.c.b16 %v243, %v239
    %v356 = vpack.c.b16 %v248, %v244
    %v357 = vpack.c.b16 %v249, %v245
    %v358 = vpack.c.b16 %v250, %v246
    %v359 = vpack.c.b16 %v251, %v247
    %v360 = vpack.c.b16 %v256, %v252
    %v361 = vpack.c.b16 %v257, %v253
    %v362 = vpack.c.b16 %v258, %v254
    %v363 = vpack.c.b16 %v259, %v255
    %v364 = vpack.c.b16 %v264, %v260
    %v365 = vpack.c.b16 %v265, %v261
    %v366 = vpack.c.b16 %v266, %v262
    %v367 = vpack.c.b16 %v267, %v263
    %v368 = vpack.c.b16 %v272, %v268
    %v369 = vpack.c.b16 %v273, %v269
    %v370 = vpack.c.b16 %v274, %v270
    %v371 = vpack.c.b16 %v275, %v271
    %v372 = vpack.c.b16 %v280, %v276
    %v373 = vpack.c.b16 %v281, %v277
    %v374 = vpack.c.b16 %v282, %v278
    %v375 = vpack.c.b16 %v283, %v279
    %v376 = vpack.c.b16 %v288, %v284
    %v377 = vpack.c.b16 %v289, %v285
    %v378 = vpack.c.b16 %v290, %v286
    %v379 = vpack.c.b16 %v291, %v287
    %v380 = vpack.c.b16 %v296, %v292
    %v381 = vpack.c.b16 %v297, %v293
    %v382 = vpack.c.b16 %v298, %v294
    %v383 = vpack.c.b16 %v299, %v295
    %v384 = vpack.c.b16 %v304, %v300
    %v385 = vpack.c.b16 %v305, %v301
    %v386 = vpack.c.b16 %v306, %v302
    %v387 = vpack.c.b16 %v307, %v303
    %v388 = vpack.c.b16 %v312, %v308
    %v389 = vpack.c.b16 %v313, %v309
    %v390 = vpack.c.b16 %v314, %v310
    %v391 = vpack.c.b16 %v315, %v311
    %v392 = vpack.c.b16 %v320, %v316
    %v393 = vpack.c.b16 %v321, %v317
    %v394 = vpack.c.b16 %v322, %v318
    %v395 = vpack.c.b16 %v323, %v319
    %v396 = vpack.c.b16 %v328, %v324
    %v397 = vpack.c.b16 %v329, %v325
    %v398 = vpack.c.b16 %v330, %v326
    %v399 = vpack.c.b16 %v331, %v327
    %v400 = vpack.c.b16 %v336, %v332
    %v401 = vpack.c.b16 %v337, %v333
    %v402 = vpack.c.b16 %v338, %v334
    %v403 = vpack.c.b16 %v339, %v335
    %468 = vmatprep.subr.bf16.mxu0 %v341
    %469 = vmatpush1.bf16.msra.mxu0 %v340
    %470 = vmatprep.subr.bf16.mxu0 %v345
    %471 = vmatpush1.bf16.msra.mxu0 %v344
    %472 = vmatprep.subr.bf16.mxu0 %v349
    %473 = vmatpush1.bf16.msra.mxu0 %v348
    %474 = vmatprep.subr.bf16.mxu0 %v353
    %475 = vmatpush1.bf16.msra.mxu0 %v352
    %476 = vmatprep.subr.bf16.mxu0 %v357
    %477 = vmatpush1.bf16.msra.mxu0 %v356
    %478 = vmatprep.subr.bf16.mxu0 %v361
    %479 = vmatpush1.bf16.msra.mxu0 %v360
    %480 = vmatprep.subr.bf16.mxu0 %v365
    %481 = vmatpush1.bf16.msra.mxu0 %v364
    %482 = vmatprep.subr.bf16.mxu0 %v369
    %483 = vmatpush1.bf16.msra.mxu0 %v368
    %484 = vmatprep.subr.bf16.mxu0 %v373
    %485 = vmatpush1.bf16.msra.mxu0 %v372
    %486 = vmatprep.subr.bf16.mxu0 %v377
    %487 = vmatpush1.bf16.msra.mxu0 %v376
    %488 = vmatprep.subr.bf16.mxu0 %v381
    %489 = vmatpush1.bf16.msra.mxu0 %v380
    %490 = vmatprep.subr.bf16.mxu0 %v385
    %491 = vmatpush1.bf16.msra.mxu0 %v384
    %492 = vmatprep.subr.bf16.mxu0 %v389
    %493 = vmatpush1.bf16.msra.mxu0 %v388
    %494 = vmatprep.subr.bf16.mxu0 %v393
    %495 = vmatpush1.bf16.msra.mxu0 %v392
    %496 = vmatprep.subr.bf16.mxu0 %v397
    %497 = vmatpush1.bf16.msra.mxu0 %v396
    %498 = vmatprep.subr.bf16.mxu0 %v401
    %499 = vmatpush1.bf16.msra.mxu0 %v400
    %500 = vmatprep.mubr.bf16.mxu0 %v126
    %501 = vmatmul.mubr.bf16.gmra.mrb[0].mxu0 %v125
    %v502 = vpop.f32.mrb[0].mxu0
    %v503 = vadd.f32 %v131, %v502
    %v504 = vpop.f32.mrb[0].mxu0
    %v505 = vadd.f32 %v135, %v504
    %v506 = vpop.f32.mrb[0].mxu0
    %v507 = vpop.f32.mrb[0].mxu0
    %508 = vdwg.mxu0
    %509 = vmatprep.subr.bf16.mxu0 %v343
    %510 = vmatpush1.bf16.msra.mxu0 %v342
    %511 = vmatprep.subr.bf16.mxu0 %v347
    %512 = vmatpush1.bf16.msra.mxu0 %v346
    %513 = vmatprep.subr.bf16.mxu0 %v351
    %514 = vmatpush1.bf16.msra.mxu0 %v350
    %515 = vmatprep.subr.bf16.mxu0 %v355
    %516 = vmatpush1.bf16.msra.mxu0 %v354
    %517 = vmatprep.subr.bf16.mxu0 %v359
    %518 = vmatpush1.bf16.msra.mxu0 %v358
    %519 = vmatprep.subr.bf16.mxu0 %v363
    %520 = vmatpush1.bf16.msra.mxu0 %v362
    %521 = vmatprep.subr.bf16.mxu0 %v367
    %522 = vmatpush1.bf16.msra.mxu0 %v366
    %523 = vmatprep.subr.bf16.mxu0 %v371
    %524 = vmatpush1.bf16.msra.mxu0 %v370
    %525 = vmatprep.subr.bf16.mxu0 %v375
    %526 = vmatpush1.bf16.msra.mxu0 %v374
    %527 = vmatprep.subr.bf16.mxu0 %v379
    %528 = vmatpush1.bf16.msra.mxu0 %v378
    %529 = vmatprep.subr.bf16.mxu0 %v383
    %530 = vmatpush1.bf16.msra.mxu0 %v382
    %531 = vmatprep.subr.bf16.mxu0 %v387
    %532 = vmatpush1.bf16.msra.mxu0 %v386
    %533 = vmatprep.subr.bf16.mxu0 %v391
    %534 = vmatpush1.bf16.msra.mxu0 %v390
    %535 = vmatprep.subr.bf16.mxu0 %v395
    %536 = vmatpush1.bf16.msra.mxu0 %v394
    %537 = vmatprep.subr.bf16.mxu0 %v399
    %538 = vmatpush1.bf16.msra.mxu0 %v398
    %539 = vmatprep.subr.bf16.mxu0 %v403
    %540 = vmatpush1.bf16.msra.mxu0 %v402
    %541 = vmatprep.mubr.bf16.mxu0 %v126
    %542 = vmatmul.mubr.bf16.gmra.mrb[0].mxu0 %v125
    %v543 = vpop.f32.mrb[0].mxu0
    %v544 = vadd.f32 %v139, %v543
    %v545 = vpop.f32.mrb[0].mxu0
    %v546 = vadd.f32 %v143, %v545
    %v547 = vpop.f32.mrb[0].mxu0
    %v548 = vpop.f32.mrb[0].mxu0
    %549 = vdwg.mxu0
    %v550 = vmul.f32 %v503, 0.5
    %v551 = vtanh.pop %v550
    %v552 = vmul.f32 %v551, 0.5
    %v553 = vadd.f32 %v552, 0.5
    %v554 = vmul.f32 %v505, 0.5
    %v555 = vtanh.pop %v554
    %v556 = vmul.f32 %v555, 0.5
    %v557 = vadd.f32 %v556, 0.5
    %v558 = vtanh.pop %v544
    %v559 = vmul.f32 %v546, 0.5
    %v560 = vtanh.pop %v559
    %v561 = vmul.f32 %v560, 0.5
    %v562 = vadd.f32 %v561, 0.5
    %v563 = vmul.f32 %v557, %v124
    %v564 = vmul.f32 %v553, %v558
    %v565 = vadd.f32 %v563, %v564
    %v566 = vtanh.pop %v565
    %v567 = vmul.f32 %v562, %v566
    %v568 = vstv %s122
    %vm569 = vcmp.gt.s32.totalorder %v121, %v568
    %v570 = vsel %vm569, 1, 0
    %571 = vset.pattern.permute.xlu0 0
    %572 = vperm.xlu0 %571, %v570
    %v573 = vpop.permute.xlu0 %572
    %vm574 = vcmp.eq.s32.totalorder %v573, 1
    %v575 = vsel %vm574, %v567, %v123
    %v576 = vsel %vm574, %v565, %v124
    %v578 = vcombine.high %v575, %v575
    %v580 = vunpack.c.l.s4 1966171168
    %v581 = vunpack.c.0.s8 %v580
    %v582 = vlaneseq
    %v583 = vshrl.u32 %v582, 7
    %v584 = vsub.s32 %v581, %v583
    %v585 = vrot.slane %v575, %v584
    %v587 = vunpack.c.l.s4 1966171168
    %v588 = vunpack.c.0.s8 %v587
    %v589 = vlaneseq
    %v590 = vshrl.u32 %v589, 7
    %v591 = vsub.s32 %v588, %v590
    %v592 = vrot.slane %v578, %v591
    %v593 = vcombine.high %v585, %v585
    %v594 = vcombine.high %v592, %v592
    %v596 = vunpack.c.l.s4 1966171168
    %v597 = vunpack.c.0.s8 %v596
    %v598 = vlaneseq
    %v599 = vshrl.u32 %v598, 7
    %v600 = vsub.s32 %v597, %v599
    %v601 = vrot.slane %v585, %v600
    %v603 = vunpack.c.l.s4 1966171168
    %v604 = vunpack.c.0.s8 %v603
    %v605 = vlaneseq
    %v606 = vshrl.u32 %v605, 7
    %v607 = vsub.s32 %v604, %v606
    %v608 = vrot.slane %v592, %v607
    %v610 = vunpack.c.l.s4 1966171168
    %v611 = vunpack.c.0.s8 %v610
    %v612 = vlaneseq
    %v613 = vshrl.u32 %v612, 7
    %v614 = vsub.s32 %v611, %v613
    %v615 = vrot.slane %v593, %v614
    %v617 = vunpack.c.l.s4 1966171168
    %v618 = vunpack.c.0.s8 %v617
    %v619 = vlaneseq
    %v620 = vshrl.u32 %v619, 7
    %v621 = vsub.s32 %v618, %v620
    %v622 = vrot.slane %v594, %v621
    %v623 = vcombine.high %v601, %v601
    %v624 = vcombine.high %v608, %v608
    %v625 = vcombine.high %v615, %v615
    %v626 = vcombine.high %v622, %v622
    %635 = vst [vmem:[#allocation9] sm:$0x1] %v601
    %636 = vst [vmem:[#allocation9 + $0x8] sm:$0x1] %v615
    %637 = vst [vmem:[#allocation9 + $0x10] sm:$0x1] %v623
    %638 = vst [vmem:[#allocation9 + $0x18] sm:$0x1] %v625
    %639 = vst [vmem:[#allocation9 + $0x20] sm:$0x1] %v608
    %640 = vst [vmem:[#allocation9 + $0x28] sm:$0x1] %v622
    %641 = vst [vmem:[#allocation9 + $0x30] sm:$0x1] %v624
    %642 = vst [vmem:[#allocation9 + $0x38] sm:$0x1] %v626
    %s643 = scalar_lea.vmem [#allocation4], 4
    %v644 = vld [vmem:[%s643] sm:$0xf]
    %v645 = vpack.c.bf16 %v575, %v575
    %646 = vmatprep.subr.bf16.mxu0 %v341
    %647 = vmatpush1.bf16.msra.mxu0 %v340
    %648 = vmatprep.subr.bf16.mxu0 %v345
    %649 = vmatpush1.bf16.msra.mxu0 %v344
    %650 = vmatprep.subr.bf16.mxu0 %v349
    %651 = vmatpush1.bf16.msra.mxu0 %v348
    %652 = vmatprep.subr.bf16.mxu0 %v353
    %653 = vmatpush1.bf16.msra.mxu0 %v352
    %654 = vmatprep.subr.bf16.mxu0 %v357
    %655 = vmatpush1.bf16.msra.mxu0 %v356
    %656 = vmatprep.subr.bf16.mxu0 %v361
    %657 = vmatpush1.bf16.msra.mxu0 %v360
    %658 = vmatprep.subr.bf16.mxu0 %v365
    %659 = vmatpush1.bf16.msra.mxu0 %v364
    %660 = vmatprep.subr.bf16.mxu0 %v369
    %661 = vmatpush1.bf16.msra.mxu0 %v368
    %662 = vmatprep.subr.bf16.mxu0 %v373
    %663 = vmatpush1.bf16.msra.mxu0 %v372
    %664 = vmatprep.subr.bf16.mxu0 %v377
    %665 = vmatpush1.bf16.msra.mxu0 %v376
    %666 = vmatprep.subr.bf16.mxu0 %v381
    %667 = vmatpush1.bf16.msra.mxu0 %v380
    %668 = vmatprep.subr.bf16.mxu0 %v385
    %669 = vmatpush1.bf16.msra.mxu0 %v384
    %670 = vmatprep.subr.bf16.mxu0 %v389
    %671 = vmatpush1.bf16.msra.mxu0 %v388
    %672 = vmatprep.subr.bf16.mxu0 %v393
    %673 = vmatpush1.bf16.msra.mxu0 %v392
    %674 = vmatprep.subr.bf16.mxu0 %v397
    %675 = vmatpush1.bf16.msra.mxu0 %v396
    %676 = vmatprep.subr.bf16.mxu0 %v401
    %677 = vmatpush1.bf16.msra.mxu0 %v400
    %678 = vmatprep.mubr.bf16.mxu0 %v645
    %679 = vmatmul.mubr.bf16.gmra.mrb[0].mxu0 %v644
    %v680 = vpop.f32.mrb[0].mxu0
    %v681 = vadd.f32 %v131, %v680
    %v682 = vpop.f32.mrb[0].mxu0
    %v683 = vadd.f32 %v135, %v682
    %v684 = vpop.f32.mrb[0].mxu0
    %v685 = vpop.f32.mrb[0].mxu0
    %686 = vdwg.mxu0
    %687 = vmatprep.subr.bf16.mxu0 %v343
    %688 = vmatpush1.bf16.msra.mxu0 %v342
    %689 = vmatprep.subr.bf16.mxu0 %v347
    %690 = vmatpush1.bf16.msra.mxu0 %v346
    %691 = vmatprep.subr.bf16.mxu0 %v351
    %692 = vmatpush1.bf16.msra.mxu0 %v350
    %693 = vmatprep.subr.bf16.mxu0 %v355
    %694 = vmatpush1.bf16.msra.mxu0 %v354
    %695 = vmatprep.subr.bf16.mxu0 %v359
    %696 = vmatpush1.bf16.msra.mxu0 %v358
    %697 = vmatprep.subr.bf16.mxu0 %v363
    %698 = vmatpush1.bf16.msra.mxu0 %v362
    %699 = vmatprep.subr.bf16.mxu0 %v367
    %700 = vmatpush1.bf16.msra.mxu0 %v366
    %701 = vmatprep.subr.bf16.mxu0 %v371
    %702 = vmatpush1.bf16.msra.mxu0 %v370
    %703 = vmatprep.subr.bf16.mxu0 %v375
    %704 = vmatpush1.bf16.msra.mxu0 %v374
    %705 = vmatprep.subr.bf16.mxu0 %v379
    %706 = vmatpush1.bf16.msra.mxu0 %v378
    %707 = vmatprep.subr.bf16.mxu0 %v383
    %708 = vmatpush1.bf16.msra.mxu0 %v382
    %709 = vmatprep.subr.bf16.mxu0 %v387
    %710 = vmatpush1.bf16.msra.mxu0 %v386
    %711 = vmatprep.subr.bf16.mxu0 %v391
    %712 = vmatpush1.bf16.msra.mxu0 %v390
    %713 = vmatprep.subr.bf16.mxu0 %v395
    %714 = vmatpush1.bf16.msra.mxu0 %v394
    %715 = vmatprep.subr.bf16.mxu0 %v399
    %716 = vmatpush1.bf16.msra.mxu0 %v398
    %717 = vmatprep.subr.bf16.mxu0 %v403
    %718 = vmatpush1.bf16.msra.mxu0 %v402
    %719 = vmatprep.mubr.bf16.mxu0 %v645
    %720 = vmatmul.mubr.bf16.gmra.mrb[0].mxu0 %v644
    %v721 = vpop.f32.mrb[0].mxu0
    %v722 = vadd.f32 %v139, %v721
    %v723 = vpop.f32.mrb[0].mxu0
    %v724 = vadd.f32 %v143, %v723
    %v725 = vpop.f32.mrb[0].mxu0
    %v726 = vpop.f32.mrb[0].mxu0
    %727 = vdwg.mxu0
    %v728 = vmul.f32 %v681, 0.5
    %v729 = vtanh.pop %v728
    %v730 = vmul.f32 %v729, 0.5
    %v731 = vadd.f32 %v730, 0.5
    %v732 = vmul.f32 %v683, 0.5
    %v733 = vtanh.pop %v732
    %v734 = vmul.f32 %v733, 0.5
    %v735 = vadd.f32 %v734, 0.5
    %v736 = vtanh.pop %v722
    %v737 = vmul.f32 %v724, 0.5
    %v738 = vtanh.pop %v737
    %v739 = vmul.f32 %v738, 0.5
    %v740 = vadd.f32 %v739, 0.5
    %v741 = vmul.f32 %v735, %v576
    %v742 = vmul.f32 %v731, %v736
    %v743 = vadd.f32 %v741, %v742
    %v744 = vtanh.pop %v743
    %v745 = vmul.f32 %v740, %v744
    %s746 = sadd.s32 %s122, 1
    %v747 = vstv %s746
    %vm748 = vcmp.gt.s32.totalorder %v121, %v747
    %v749 = vsel %vm748, 1, 0
    %750 = vset.pattern.permute.xlu0 0
    %751 = vperm.xlu0 %750, %v749
    %v752 = vpop.permute.xlu0 %751
    %vm753 = vcmp.eq.s32.totalorder %v752, 1
    %v754 = vsel %vm753, %v745, %v575
    %v755 = vsel %vm753, %v743, %v576
    %v757 = vcombine.high %v754, %v754
    %v759 = vunpack.c.l.s4 1966171168
    %v760 = vunpack.c.0.s8 %v759
    %v761 = vlaneseq
    %v762 = vshrl.u32 %v761, 7
    %v763 = vsub.s32 %v760, %v762
    %v764 = vrot.slane %v754, %v763
    %v766 = vunpack.c.l.s4 1966171168
    %v767 = vunpack.c.0.s8 %v766
    %v768 = vlaneseq
    %v769 = vshrl.u32 %v768, 7
    %v770 = vsub.s32 %v767, %v769
    %v771 = vrot.slane %v757, %v770
    %v772 = vcombine.high %v764, %v764
    %v773 = vcombine.high %v771, %v771
    %v775 = vunpack.c.l.s4 1966171168
    %v776 = vunpack.c.0.s8 %v775
    %v777 = vlaneseq
    %v778 = vshrl.u32 %v777, 7
    %v779 = vsub.s32 %v776, %v778
    %v780 = vrot.slane %v764, %v779
    %v782 = vunpack.c.l.s4 1966171168
    %v783 = vunpack.c.0.s8 %v782
    %v784 = vlaneseq
    %v785 = vshrl.u32 %v784, 7
    %v786 = vsub.s32 %v783, %v785
    %v787 = vrot.slane %v771, %v786
    %v789 = vunpack.c.l.s4 1966171168
    %v790 = vunpack.c.0.s8 %v789
    %v791 = vlaneseq
    %v792 = vshrl.u32 %v791, 7
    %v793 = vsub.s32 %v790, %v792
    %v794 = vrot.slane %v772, %v793
    %v796 = vunpack.c.l.s4 1966171168
    %v797 = vunpack.c.0.s8 %v796
    %v798 = vlaneseq
    %v799 = vshrl.u32 %v798, 7
    %v800 = vsub.s32 %v797, %v799
    %v801 = vrot.slane %v773, %v800
    %v802 = vcombine.high %v780, %v780
    %v803 = vcombine.high %v787, %v787
    %v804 = vcombine.high %v794, %v794
    %v805 = vcombine.high %v801, %v801
    %814 = vst [vmem:[#allocation9 + $0x1] sm:$0x1] %v780
    %815 = vst [vmem:[#allocation9 + $0x9] sm:$0x1] %v794
    %816 = vst [vmem:[#allocation9 + $0x11] sm:$0x1] %v802
    %817 = vst [vmem:[#allocation9 + $0x19] sm:$0x1] %v804
    %818 = vst [vmem:[#allocation9 + $0x21] sm:$0x1] %v787
    %819 = vst [vmem:[#allocation9 + $0x29] sm:$0x1] %v801
    %820 = vst [vmem:[#allocation9 + $0x31] sm:$0x1] %v803
    %821 = vst [vmem:[#allocation9 + $0x39] sm:$0x1] %v805
    %s822 = scalar_lea.vmem [#allocation4], 8
    %v823 = vld [vmem:[%s822] sm:$0xf]
    %v824 = vpack.c.bf16 %v754, %v754
    %825 = vmatprep.subr.bf16.mxu0 %v341
    %826 = vmatpush1.bf16.msra.mxu0 %v340
    %827 = vmatprep.subr.bf16.mxu0 %v345
    %828 = vmatpush1.bf16.msra.mxu0 %v344
    %829 = vmatprep.subr.bf16.mxu0 %v349
    %830 = vmatpush1.bf16.msra.mxu0 %v348
    %831 = vmatprep.subr.bf16.mxu0 %v353
    %832 = vmatpush1.bf16.msra.mxu0 %v352
    %833 = vmatprep.subr.bf16.mxu0 %v357
    %834 = vmatpush1.bf16.msra.mxu0 %v356
    %835 = vmatprep.subr.bf16.mxu0 %v361
    %836 = vmatpush1.bf16.msra.mxu0 %v360
    %837 = vmatprep.subr.bf16.mxu0 %v365
    %838 = vmatpush1.bf16.msra.mxu0 %v364
    %839 = vmatprep.subr.bf16.mxu0 %v369
    %840 = vmatpush1.bf16.msra.mxu0 %v368
    %841 = vmatprep.subr.bf16.mxu0 %v373
    %842 = vmatpush1.bf16.msra.mxu0 %v372
    %843 = vmatprep.subr.bf16.mxu0 %v377
    %844 = vmatpush1.bf16.msra.mxu0 %v376
    %845 = vmatprep.subr.bf16.mxu0 %v381
    %846 = vmatpush1.bf16.msra.mxu0 %v380
    %847 = vmatprep.subr.bf16.mxu0 %v385
    %848 = vmatpush1.bf16.msra.mxu0 %v384
    %849 = vmatprep.subr.bf16.mxu0 %v389
    %850 = vmatpush1.bf16.msra.mxu0 %v388
    %851 = vmatprep.subr.bf16.mxu0 %v393
    %852 = vmatpush1.bf16.msra.mxu0 %v392
    %853 = vmatprep.subr.bf16.mxu0 %v397
    %854 = vmatpush1.bf16.msra.mxu0 %v396
    %855 = vmatprep.subr.bf16.mxu0 %v401
    %856 = vmatpush1.bf16.msra.mxu0 %v400
    %857 = vmatprep.mubr.bf16.mxu0 %v824
    %858 = vmatmul.mubr.bf16.gmra.mrb[0].mxu0 %v823
    %v859 = vpop.f32.mrb[0].mxu0
    %v860 = vadd.f32 %v131, %v859
    %v861 = vpop.f32.mrb[0].mxu0
    %v862 = vadd.f32 %v135, %v861
    %v863 = vpop.f32.mrb[0].mxu0
    %v864 = vpop.f32.mrb[0].mxu0
    %865 = vdwg.mxu0
    %866 = vmatprep.subr.bf16.mxu0 %v343
    %867 = vmatpush1.bf16.msra.mxu0 %v342
    %868 = vmatprep.subr.bf16.mxu0 %v347
    %869 = vmatpush1.bf16.msra.mxu0 %v346
    %870 = vmatprep.subr.bf16.mxu0 %v351
    %871 = vmatpush1.bf16.msra.mxu0 %v350
    %872 = vmatprep.subr.bf16.mxu0 %v355
    %873 = vmatpush1.bf16.msra.mxu0 %v354
    %874 = vmatprep.subr.bf16.mxu0 %v359
    %875 = vmatpush1.bf16.msra.mxu0 %v358
    %876 = vmatprep.subr.bf16.mxu0 %v363
    %877 = vmatpush1.bf16.msra.mxu0 %v362
    %878 = vmatprep.subr.bf16.mxu0 %v367
    %879 = vmatpush1.bf16.msra.mxu0 %v366
    %880 = vmatprep.subr.bf16.mxu0 %v371
    %881 = vmatpush1.bf16.msra.mxu0 %v370
    %882 = vmatprep.subr.bf16.mxu0 %v375
    %883 = vmatpush1.bf16.msra.mxu0 %v374
    %884 = vmatprep.subr.bf16.mxu0 %v379
    %885 = vmatpush1.bf16.msra.mxu0 %v378
    %886 = vmatprep.subr.bf16.mxu0 %v383
    %887 = vmatpush1.bf16.msra.mxu0 %v382
    %888 = vmatprep.subr.bf16.mxu0 %v387
    %889 = vmatpush1.bf16.msra.mxu0 %v386
    %890 = vmatprep.subr.bf16.mxu0 %v391
    %891 = vmatpush1.bf16.msra.mxu0 %v390
    %892 = vmatprep.subr.bf16.mxu0 %v395
    %893 = vmatpush1.bf16.msra.mxu0 %v394
    %894 = vmatprep.subr.bf16.mxu0 %v399
    %895 = vmatpush1.bf16.msra.mxu0 %v398
    %896 = vmatprep.subr.bf16.mxu0 %v403
    %897 = vmatpush1.bf16.msra.mxu0 %v402
    %898 = vmatprep.mubr.bf16.mxu0 %v824
    %899 = vmatmul.mubr.bf16.gmra.mrb[0].mxu0 %v823
    %v900 = vpop.f32.mrb[0].mxu0
    %v901 = vadd.f32 %v139, %v900
    %v902 = vpop.f32.mrb[0].mxu0
    %v903 = vadd.f32 %v143, %v902
    %v904 = vpop.f32.mrb[0].mxu0
    %v905 = vpop.f32.mrb[0].mxu0
    %906 = vdwg.mxu0
    %v907 = vmul.f32 %v860, 0.5
    %v908 = vtanh.pop %v907
    %v909 = vmul.f32 %v908, 0.5
    %v910 = vadd.f32 %v909, 0.5
    %v911 = vmul.f32 %v862, 0.5
    %v912 = vtanh.pop %v911
    %v913 = vmul.f32 %v912, 0.5
    %v914 = vadd.f32 %v913, 0.5
    %v915 = vtanh.pop %v901
    %v916 = vmul.f32 %v903, 0.5
    %v917 = vtanh.pop %v916
    %v918 = vmul.f32 %v917, 0.5
    %v919 = vadd.f32 %v918, 0.5
    %v920 = vmul.f32 %v914, %v755
    %v921 = vmul.f32 %v910, %v915
    %v922 = vadd.f32 %v920, %v921
    %v923 = vtanh.pop %v922
    %v924 = vmul.f32 %v919, %v923
    %s925 = sadd.s32 %s122, 2
    %v926 = vstv %s925
    %vm927 = vcmp.gt.s32.totalorder %v121, %v926
    %v928 = vsel %vm927, 1, 0
    %929 = vset.pattern.permute.xlu0 0
    %930 = vperm.xlu0 %929, %v928
    %v931 = vpop.permute.xlu0 %930
    %vm932 = vcmp.eq.s32.totalorder %v931, 1
    %v933 = vsel %vm932, %v924, %v754
    %v934 = vsel %vm932, %v922, %v755
    %v936 = vcombine.high %v933, %v933
    %v938 = vunpack.c.l.s4 1966171168
    %v939 = vunpack.c.0.s8 %v938
    %v940 = vlaneseq
    %v941 = vshrl.u32 %v940, 7
    %v942 = vsub.s32 %v939, %v941
    %v943 = vrot.slane %v933, %v942
    %v945 = vunpack.c.l.s4 1966171168
    %v946 = vunpack.c.0.s8 %v945
    %v947 = vlaneseq
    %v948 = vshrl.u32 %v947, 7
    %v949 = vsub.s32 %v946, %v948
    %v950 = vrot.slane %v936, %v949
    %v951 = vcombine.high %v943, %v943
    %v952 = vcombine.high %v950, %v950
    %v954 = vunpack.c.l.s4 1966171168
    %v955 = vunpack.c.0.s8 %v954
    %v956 = vlaneseq
    %v957 = vshrl.u32 %v956, 7
    %v958 = vsub.s32 %v955, %v957
    %v959 = vrot.slane %v943, %v958
    %v961 = vunpack.c.l.s4 1966171168
    %v962 = vunpack.c.0.s8 %v961
    %v963 = vlaneseq
    %v964 = vshrl.u32 %v963, 7
    %v965 = vsub.s32 %v962, %v964
    %v966 = vrot.slane %v950, %v965
    %v968 = vunpack.c.l.s4 1966171168
    %v969 = vunpack.c.0.s8 %v968
    %v970 = vlaneseq
    %v971 = vshrl.u32 %v970, 7
    %v972 = vsub.s32 %v969, %v971
    %v973 = vrot.slane %v951, %v972
    %v975 = vunpack.c.l.s4 1966171168
    %v976 = vunpack.c.0.s8 %v975
    %v977 = vlaneseq
    %v978 = vshrl.u32 %v977, 7
    %v979 = vsub.s32 %v976, %v978
    %v980 = vrot.slane %v952, %v979
    %v981 = vcombine.high %v959, %v959
    %v982 = vcombine.high %v966, %v966
    %v983 = vcombine.high %v973, %v973
    %v984 = vcombine.high %v980, %v980
    %993 = vst [vmem:[#allocation9 + $0x2] sm:$0x1] %v959
    %994 = vst [vmem:[#allocation9 + $0xa] sm:$0x1] %v973
    %995 = vst [vmem:[#allocation9 + $0x12] sm:$0x1] %v981
    %996 = vst [vmem:[#allocation9 + $0x1a] sm:$0x1] %v983
    %997 = vst [vmem:[#allocation9 + $0x22] sm:$0x1] %v966
    %998 = vst [vmem:[#allocation9 + $0x2a] sm:$0x1] %v980
    %999 = vst [vmem:[#allocation9 + $0x32] sm:$0x1] %v982
    %1000 = vst [vmem:[#allocation9 + $0x3a] sm:$0x1] %v984
    %s1001 = scalar_lea.vmem [#allocation4], 12
    %v1002 = vld [vmem:[%s1001] sm:$0xf]
    %v1003 = vpack.c.bf16 %v933, %v933
    %1004 = vmatprep.subr.bf16.mxu0 %v341
    %1005 = vmatpush1.bf16.msra.mxu0 %v340
    %1006 = vmatprep.subr.bf16.mxu0 %v345
    %1007 = vmatpush1.bf16.msra.mxu0 %v344
    %1008 = vmatprep.subr.bf16.mxu0 %v349
    %1009 = vmatpush1.bf16.msra.mxu0 %v348
    %1010 = vmatprep.subr.bf16.mxu0 %v353
    %1011 = vmatpush1.bf16.msra.mxu0 %v352
    %1012 = vmatprep.subr.bf16.mxu0 %v357
    %1013 = vmatpush1.bf16.msra.mxu0 %v356
    %1014 = vmatprep.subr.bf16.mxu0 %v361
    %1015 = vmatpush1.bf16.msra.mxu0 %v360
    %1016 = vmatprep.subr.bf16.mxu0 %v365
    %1017 = vmatpush1.bf16.msra.mxu0 %v364
    %1018 = vmatprep.subr.bf16.mxu0 %v369
    %1019 = vmatpush1.bf16.msra.mxu0 %v368
    %1020 = vmatprep.subr.bf16.mxu0 %v373
    %1021 = vmatpush1.bf16.msra.mxu0 %v372
    %1022 = vmatprep.subr.bf16.mxu0 %v377
    %1023 = vmatpush1.bf16.msra.mxu0 %v376
    %1024 = vmatprep.subr.bf16.mxu0 %v381
    %1025 = vmatpush1.bf16.msra.mxu0 %v380
    %1026 = vmatprep.subr.bf16.mxu0 %v385
    %1027 = vmatpush1.bf16.msra.mxu0 %v384
    %1028 = vmatprep.subr.bf16.mxu0 %v389
    %1029 = vmatpush1.bf16.msra.mxu0 %v388
    %1030 = vmatprep.subr.bf16.mxu0 %v393
    %1031 = vmatpush1.bf16.msra.mxu0 %v392
    %1032 = vmatprep.subr.bf16.mxu0 %v397
    %1033 = vmatpush1.bf16.msra.mxu0 %v396
    %1034 = vmatprep.subr.bf16.mxu0 %v401
    %1035 = vmatpush1.bf16.msra.mxu0 %v400
    %1036 = vmatprep.mubr.bf16.mxu0 %v1003
    %1037 = vmatmul.mubr.bf16.gmra.mrb[0].mxu0 %v1002
    %v1038 = vpop.f32.mrb[0].mxu0
    %v1039 = vadd.f32 %v131, %v1038
    %v1040 = vpop.f32.mrb[0].mxu0
    %v1041 = vadd.f32 %v135, %v1040
    %v1042 = vpop.f32.mrb[0].mxu0
    %v1043 = vpop.f32.mrb[0].mxu0
    %1044 = vdwg.mxu0
    %1045 = vmatprep.subr.bf16.mxu0 %v343
    %1046 = vmatpush1.bf16.msra.mxu0 %v342
    %1047 = vmatprep.subr.bf16.mxu0 %v347
    %1048 = vmatpush1.bf16.msra.mxu0 %v346
    %1049 = vmatprep.subr.bf16.mxu0 %v351
    %1050 = vmatpush1.bf16.msra.mxu0 %v350
    %1051 = vmatprep.subr.bf16.mxu0 %v355
    %1052 = vmatpush1.bf16.msra.mxu0 %v354
    %1053 = vmatprep.subr.bf16.mxu0 %v359
    %1054 = vmatpush1.bf16.msra.mxu0 %v358
    %1055 = vmatprep.subr.bf16.mxu0 %v363
    %1056 = vmatpush1.bf16.msra.mxu0 %v362
    %1057 = vmatprep.subr.bf16.mxu0 %v367
    %1058 = vmatpush1.bf16.msra.mxu0 %v366
    %1059 = vmatprep.subr.bf16.mxu0 %v371
    %1060 = vmatpush1.bf16.msra.mxu0 %v370
    %1061 = vmatprep.subr.bf16.mxu0 %v375
    %1062 = vmatpush1.bf16.msra.mxu0 %v374
    %1063 = vmatprep.subr.bf16.mxu0 %v379
    %1064 = vmatpush1.bf16.msra.mxu0 %v378
    %1065 = vmatprep.subr.bf16.mxu0 %v383
    %1066 = vmatpush1.bf16.msra.mxu0 %v382
    %1067 = vmatprep.subr.bf16.mxu0 %v387
    %1068 = vmatpush1.bf16.msra.mxu0 %v386
    %1069 = vmatprep.subr.bf16.mxu0 %v391
    %1070 = vmatpush1.bf16.msra.mxu0 %v390
    %1071 = vmatprep.subr.bf16.mxu0 %v395
    %1072 = vmatpush1.bf16.msra.mxu0 %v394
    %1073 = vmatprep.subr.bf16.mxu0 %v399
    %1074 = vmatpush1.bf16.msra.mxu0 %v398
    %1075 = vmatprep.subr.bf16.mxu0 %v403
    %1076 = vmatpush1.bf16.msra.mxu0 %v402
    %1077 = vmatprep.mubr.bf16.mxu0 %v1003
    %1078 = vmatmul.mubr.bf16.gmra.mrb[0].mxu0 %v1002
    %v1079 = vpop.f32.mrb[0].mxu0
    %v1080 = vadd.f32 %v139, %v1079
    %v1081 = vpop.f32.mrb[0].mxu0
    %v1082 = vadd.f32 %v143, %v1081
    %v1083 = vpop.f32.mrb[0].mxu0
    %v1084 = vpop.f32.mrb[0].mxu0
    %1085 = vdwg.mxu0
    %v1086 = vmul.f32 %v1039, 0.5
    %v1087 = vtanh.pop %v1086
    %v1088 = vmul.f32 %v1087, 0.5
    %v1089 = vadd.f32 %v1088, 0.5
    %v1090 = vmul.f32 %v1041, 0.5
    %v1091 = vtanh.pop %v1090
    %v1092 = vmul.f32 %v1091, 0.5
    %v1093 = vadd.f32 %v1092, 0.5
    %v1094 = vtanh.pop %v1080
    %v1095 = vmul.f32 %v1082, 0.5
    %v1096 = vtanh.pop %v1095
    %v1097 = vmul.f32 %v1096, 0.5
    %v1098 = vadd.f32 %v1097, 0.5
    %v1099 = vmul.f32 %v1093, %v934
    %v1100 = vmul.f32 %v1089, %v1094
    %v1101 = vadd.f32 %v1099, %v1100
    %v1102 = vtanh.pop %v1101
    %v1103 = vmul.f32 %v1098, %v1102
    %s1104 = sadd.s32 %s122, 3
    %v1105 = vstv %s1104
    %vm1106 = vcmp.gt.s32.totalorder %v121, %v1105
    %v1107 = vsel %vm1106, 1, 0
    %1108 = vset.pattern.permute.xlu0 0
    %1109 = vperm.xlu0 %1108, %v1107
    %v1110 = vpop.permute.xlu0 %1109
    %vm1111 = vcmp.eq.s32.totalorder %v1110, 1
    %v1112 = vsel %vm1111, %v1103, %v933
    %v1113 = vsel %vm1111, %v1101, %v934
    %v1115 = vcombine.high %v1112, %v1112
    %v1117 = vunpack.c.l.s4 1966171168
    %v1118 = vunpack.c.0.s8 %v1117
    %v1119 = vlaneseq
    %v1120 = vshrl.u32 %v1119, 7
    %v1121 = vsub.s32 %v1118, %v1120
    %v1122 = vrot.slane %v1112, %v1121
    %v1124 = vunpack.c.l.s4 1966171168
    %v1125 = vunpack.c.0.s8 %v1124
    %v1126 = vlaneseq
    %v1127 = vshrl.u32 %v1126, 7
    %v1128 = vsub.s32 %v1125, %v1127
    %v1129 = vrot.slane %v1115, %v1128
    %v1130 = vcombine.high %v1122, %v1122
    %v1131 = vcombine.high %v1129, %v1129
    %v1133 = vunpack.c.l.s4 1966171168
    %v1134 = vunpack.c.0.s8 %v1133
    %v1135 = vlaneseq
    %v1136 = vshrl.u32 %v1135, 7
    %v1137 = vsub.s32 %v1134, %v1136
    %v1138 = vrot.slane %v1122, %v1137
    %v1140 = vunpack.c.l.s4 1966171168
    %v1141 = vunpack.c.0.s8 %v1140
    %v1142 = vlaneseq
    %v1143 = vshrl.u32 %v1142, 7
    %v1144 = vsub.s32 %v1141, %v1143
    %v1145 = vrot.slane %v1129, %v1144
    %v1147 = vunpack.c.l.s4 1966171168
    %v1148 = vunpack.c.0.s8 %v1147
    %v1149 = vlaneseq
    %v1150 = vshrl.u32 %v1149, 7
    %v1151 = vsub.s32 %v1148, %v1150
    %v1152 = vrot.slane %v1130, %v1151
    %v1154 = vunpack.c.l.s4 1966171168
    %v1155 = vunpack.c.0.s8 %v1154
    %v1156 = vlaneseq
    %v1157 = vshrl.u32 %v1156, 7
    %v1158 = vsub.s32 %v1155, %v1157
    %v1159 = vrot.slane %v1131, %v1158
    %v1160 = vcombine.high %v1138, %v1138
    %v1161 = vcombine.high %v1145, %v1145
    %v1162 = vcombine.high %v1152, %v1152
    %v1163 = vcombine.high %v1159, %v1159
    %1172 = vst [vmem:[#allocation9 + $0x3] sm:$0x1] %v1138
    %1173 = vst [vmem:[#allocation9 + $0xb] sm:$0x1] %v1152
    %1174 = vst [vmem:[#allocation9 + $0x13] sm:$0x1] %v1160
    %1175 = vst [vmem:[#allocation9 + $0x1b] sm:$0x1] %v1162
    %1176 = vst [vmem:[#allocation9 + $0x23] sm:$0x1] %v1145
    %1177 = vst [vmem:[#allocation9 + $0x2b] sm:$0x1] %v1159
    %1178 = vst [vmem:[#allocation9 + $0x33] sm:$0x1] %v1161
    %1179 = vst [vmem:[#allocation9 + $0x3b] sm:$0x1] %v1163
    %s1180 = scalar_lea.vmem [#allocation4], 16
    %v1181 = vld [vmem:[%s1180] sm:$0xf]
    %v1182 = vpack.c.bf16 %v1112, %v1112
    %1183 = vmatprep.subr.bf16.mxu0 %v341
    %1184 = vmatpush1.bf16.msra.mxu0 %v340
    %1185 = vmatprep.subr.bf16.mxu0 %v345
    %1186 = vmatpush1.bf16.msra.mxu0 %v344
    %1187 = vmatprep.subr.bf16.mxu0 %v349
    %1188 = vmatpush1.bf16.msra.mxu0 %v348
    %1189 = vmatprep.subr.bf16.mxu0 %v353
    %1190 = vmatpush1.bf16.msra.mxu0 %v352
    %1191 = vmatprep.subr.bf16.mxu0 %v357
    %1192 = vmatpush1.bf16.msra.mxu0 %v356
    %1193 = vmatprep.subr.bf16.mxu0 %v361
    %1194 = vmatpush1.bf16.msra.mxu0 %v360
    %1195 = vmatprep.subr.bf16.mxu0 %v365
    %1196 = vmatpush1.bf16.msra.mxu0 %v364
    %1197 = vmatprep.subr.bf16.mxu0 %v369
    %1198 = vmatpush1.bf16.msra.mxu0 %v368
    %1199 = vmatprep.subr.bf16.mxu0 %v373
    %1200 = vmatpush1.bf16.msra.mxu0 %v372
    %1201 = vmatprep.subr.bf16.mxu0 %v377
    %1202 = vmatpush1.bf16.msra.mxu0 %v376
    %1203 = vmatprep.subr.bf16.mxu0 %v381
    %1204 = vmatpush1.bf16.msra.mxu0 %v380
    %1205 = vmatprep.subr.bf16.mxu0 %v385
    %1206 = vmatpush1.bf16.msra.mxu0 %v384
    %1207 = vmatprep.subr.bf16.mxu0 %v389
    %1208 = vmatpush1.bf16.msra.mxu0 %v388
    %1209 = vmatprep.subr.bf16.mxu0 %v393
    %1210 = vmatpush1.bf16.msra.mxu0 %v392
    %1211 = vmatprep.subr.bf16.mxu0 %v397
    %1212 = vmatpush1.bf16.msra.mxu0 %v396
    %1213 = vmatprep.subr.bf16.mxu0 %v401
    %1214 = vmatpush1.bf16.msra.mxu0 %v400
    %1215 = vmatprep.mubr.bf16.mxu0 %v1182
    %1216 = vmatmul.mubr.bf16.gmra.mrb[0].mxu0 %v1181
    %v1217 = vpop.f32.mrb[0].mxu0
    %v1218 = vadd.f32 %v131, %v1217
    %v1219 = vpop.f32.mrb[0].mxu0
    %v1220 = vadd.f32 %v135, %v1219
    %v1221 = vpop.f32.mrb[0].mxu0
    %v1222 = vpop.f32.mrb[0].mxu0
    %1223 = vdwg.mxu0
    %1224 = vmatprep.subr.bf16.mxu0 %v343
    %1225 = vmatpush1.bf16.msra.mxu0 %v342
    %1226 = vmatprep.subr.bf16.mxu0 %v347
    %1227 = vmatpush1.bf16.msra.mxu0 %v346
    %1228 = vmatprep.subr.bf16.mxu0 %v351
    %1229 = vmatpush1.bf16.msra.mxu0 %v350
    %1230 = vmatprep.subr.bf16.mxu0 %v355
    %1231 = vmatpush1.bf16.msra.mxu0 %v354
    %1232 = vmatprep.subr.bf16.mxu0 %v359
    %1233 = vmatpush1.bf16.msra.mxu0 %v358
    %1234 = vmatprep.subr.bf16.mxu0 %v363
    %1235 = vmatpush1.bf16.msra.mxu0 %v362
    %1236 = vmatprep.subr.bf16.mxu0 %v367
    %1237 = vmatpush1.bf16.msra.mxu0 %v366
    %1238 = vmatprep.subr.bf16.mxu0 %v371
    %1239 = vmatpush1.bf16.msra.mxu0 %v370
    %1240 = vmatprep.subr.bf16.mxu0 %v375
    %1241 = vmatpush1.bf16.msra.mxu0 %v374
    %1242 = vmatprep.subr.bf16.mxu0 %v379
    %1243 = vmatpush1.bf16.msra.mxu0 %v378
    %1244 = vmatprep.subr.bf16.mxu0 %v383
    %1245 = vmatpush1.bf16.msra.mxu0 %v382
    %1246 = vmatprep.subr.bf16.mxu0 %v387
    %1247 = vmatpush1.bf16.msra.mxu0 %v386
    %1248 = vmatprep.subr.bf16.mxu0 %v391
    %1249 = vmatpush1.bf16.msra.mxu0 %v390
    %1250 = vmatprep.subr.bf16.mxu0 %v395
    %1251 = vmatpush1.bf16.msra.mxu0 %v394
    %1252 = vmatprep.subr.bf16.mxu0 %v399
    %1253 = vmatpush1.bf16.msra.mxu0 %v398
    %1254 = vmatprep.subr.bf16.mxu0 %v403
    %1255 = vmatpush1.bf16.msra.mxu0 %v402
    %1256 = vmatprep.mubr.bf16.mxu0 %v1182
    %1257 = vmatmul.mubr.bf16.gmra.mrb[0].mxu0 %v1181
    %v1258 = vpop.f32.mrb[0].mxu0
    %v1259 = vadd.f32 %v139, %v1258
    %v1260 = vpop.f32.mrb[0].mxu0
    %v1261 = vadd.f32 %v143, %v1260
    %v1262 = vpop.f32.mrb[0].mxu0
    %v1263 = vpop.f32.mrb[0].mxu0
    %1264 = vdwg.mxu0
    %v1265 = vmul.f32 %v1218, 0.5
    %v1266 = vtanh.pop %v1265
    %v1267 = vmul.f32 %v1266, 0.5
    %v1268 = vadd.f32 %v1267, 0.5
    %v1269 = vmul.f32 %v1220, 0.5
    %v1270 = vtanh.pop %v1269
    %v1271 = vmul.f32 %v1270, 0.5
    %v1272 = vadd.f32 %v1271, 0.5
    %v1273 = vtanh.pop %v1259
    %v1274 = vmul.f32 %v1261, 0.5
    %v1275 = vtanh.pop %v1274
    %v1276 = vmul.f32 %v1275, 0.5
    %v1277 = vadd.f32 %v1276, 0.5
    %v1278 = vmul.f32 %v1272, %v1113
    %v1279 = vmul.f32 %v1268, %v1273
    %v1280 = vadd.f32 %v1278, %v1279
    %v1281 = vtanh.pop %v1280
    %v1282 = vmul.f32 %v1277, %v1281
    %s1283 = sadd.s32 %s122, 4
    %v1284 = vstv %s1283
    %vm1285 = vcmp.gt.s32.totalorder %v121, %v1284
    %v1286 = vsel %vm1285, 1, 0
    %1287 = vset.pattern.permute.xlu0 0
    %1288 = vperm.xlu0 %1287, %v1286
    %v1289 = vpop.permute.xlu0 %1288
    %vm1290 = vcmp.eq.s32.totalorder %v1289, 1
    %v1291 = vsel %vm1290, %v1282, %v1112
    %v1292 = vsel %vm1290, %v1280, %v1113
    %v1294 = vcombine.high %v1291, %v1291
    %v1296 = vunpack.c.l.s4 1966171168
    %v1297 = vunpack.c.0.s8 %v1296
    %v1298 = vlaneseq
    %v1299 = vshrl.u32 %v1298, 7
    %v1300 = vsub.s32 %v1297, %v1299
    %v1301 = vrot.slane %v1291, %v1300
    %v1303 = vunpack.c.l.s4 1966171168
    %v1304 = vunpack.c.0.s8 %v1303
    %v1305 = vlaneseq
    %v1306 = vshrl.u32 %v1305, 7
    %v1307 = vsub.s32 %v1304, %v1306
    %v1308 = vrot.slane %v1294, %v1307
    %v1309 = vcombine.high %v1301, %v1301
    %v1310 = vcombine.high %v1308, %v1308
    %v1312 = vunpack.c.l.s4 1966171168
    %v1313 = vunpack.c.0.s8 %v1312
    %v1314 = vlaneseq
    %v1315 = vshrl.u32 %v1314, 7
    %v1316 = vsub.s32 %v1313, %v1315
    %v1317 = vrot.slane %v1301, %v1316
    %v1319 = vunpack.c.l.s4 1966171168
    %v1320 = vunpack.c.0.s8 %v1319
    %v1321 = vlaneseq
    %v1322 = vshrl.u32 %v1321, 7
    %v1323 = vsub.s32 %v1320, %v1322
    %v1324 = vrot.slane %v1308, %v1323
    %v1326 = vunpack.c.l.s4 1966171168
    %v1327 = vunpack.c.0.s8 %v1326
    %v1328 = vlaneseq
    %v1329 = vshrl.u32 %v1328, 7
    %v1330 = vsub.s32 %v1327, %v1329
    %v1331 = vrot.slane %v1309, %v1330
    %v1333 = vunpack.c.l.s4 1966171168
    %v1334 = vunpack.c.0.s8 %v1333
    %v1335 = vlaneseq
    %v1336 = vshrl.u32 %v1335, 7
    %v1337 = vsub.s32 %v1334, %v1336
    %v1338 = vrot.slane %v1310, %v1337
    %v1339 = vcombine.high %v1317, %v1317
    %v1340 = vcombine.high %v1324, %v1324
    %v1341 = vcombine.high %v1331, %v1331
    %v1342 = vcombine.high %v1338, %v1338
    %1351 = vst [vmem:[#allocation9 + $0x4] sm:$0x1] %v1317
    %1352 = vst [vmem:[#allocation9 + $0xc] sm:$0x1] %v1331
    %1353 = vst [vmem:[#allocation9 + $0x14] sm:$0x1] %v1339
    %1354 = vst [vmem:[#allocation9 + $0x1c] sm:$0x1] %v1341
    %1355 = vst [vmem:[#allocation9 + $0x24] sm:$0x1] %v1324
    %1356 = vst [vmem:[#allocation9 + $0x2c] sm:$0x1] %v1338
    %1357 = vst [vmem:[#allocation9 + $0x34] sm:$0x1] %v1340
    %1358 = vst [vmem:[#allocation9 + $0x3c] sm:$0x1] %v1342
    %s1359 = scalar_lea.vmem [#allocation4], 20
    %v1360 = vld [vmem:[%s1359] sm:$0xf]
    %v1361 = vpack.c.bf16 %v1291, %v1291
    %1362 = vmatprep.subr.bf16.mxu0 %v341
    %1363 = vmatpush1.bf16.msra.mxu0 %v340
    %1364 = vmatprep.subr.bf16.mxu0 %v345
    %1365 = vmatpush1.bf16.msra.mxu0 %v344
    %1366 = vmatprep.subr.bf16.mxu0 %v349
    %1367 = vmatpush1.bf16.msra.mxu0 %v348
    %1368 = vmatprep.subr.bf16.mxu0 %v353
    %1369 = vmatpush1.bf16.msra.mxu0 %v352
    %1370 = vmatprep.subr.bf16.mxu0 %v357
    %1371 = vmatpush1.bf16.msra.mxu0 %v356
    %1372 = vmatprep.subr.bf16.mxu0 %v361
    %1373 = vmatpush1.bf16.msra.mxu0 %v360
    %1374 = vmatprep.subr.bf16.mxu0 %v365
    %1375 = vmatpush1.bf16.msra.mxu0 %v364
    %1376 = vmatprep.subr.bf16.mxu0 %v369
    %1377 = vmatpush1.bf16.msra.mxu0 %v368
    %1378 = vmatprep.subr.bf16.mxu0 %v373
    %1379 = vmatpush1.bf16.msra.mxu0 %v372
    %1380 = vmatprep.subr.bf16.mxu0 %v377
    %1381 = vmatpush1.bf16.msra.mxu0 %v376
    %1382 = vmatprep.subr.bf16.mxu0 %v381
    %1383 = vmatpush1.bf16.msra.mxu0 %v380
    %1384 = vmatprep.subr.bf16.mxu0 %v385
    %1385 = vmatpush1.bf16.msra.mxu0 %v384
    %1386 = vmatprep.subr.bf16.mxu0 %v389
    %1387 = vmatpush1.bf16.msra.mxu0 %v388
    %1388 = vmatprep.subr.bf16.mxu0 %v393
    %1389 = vmatpush1.bf16.msra.mxu0 %v392
    %1390 = vmatprep.subr.bf16.mxu0 %v397
    %1391 = vmatpush1.bf16.msra.mxu0 %v396
    %1392 = vmatprep.subr.bf16.mxu0 %v401
    %1393 = vmatpush1.bf16.msra.mxu0 %v400
    %1394 = vmatprep.mubr.bf16.mxu0 %v1361
    %1395 = vmatmul.mubr.bf16.gmra.mrb[0].mxu0 %v1360
    %v1396 = vpop.f32.mrb[0].mxu0
    %v1397 = vadd.f32 %v131, %v1396
    %v1398 = vpop.f32.mrb[0].mxu0
    %v1399 = vadd.f32 %v135, %v1398
    %v1400 = vpop.f32.mrb[0].mxu0
    %v1401 = vpop.f32.mrb[0].mxu0
    %1402 = vdwg.mxu0
    %1403 = vmatprep.subr.bf16.mxu0 %v343
    %1404 = vmatpush1.bf16.msra.mxu0 %v342
    %1405 = vmatprep.subr.bf16.mxu0 %v347
    %1406 = vmatpush1.bf16.msra.mxu0 %v346
    %1407 = vmatprep.subr.bf16.mxu0 %v351
    %1408 = vmatpush1.bf16.msra.mxu0 %v350
    %1409 = vmatprep.subr.bf16.mxu0 %v355
    %1410 = vmatpush1.bf16.msra.mxu0 %v354
    %1411 = vmatprep.subr.bf16.mxu0 %v359
    %1412 = vmatpush1.bf16.msra.mxu0 %v358
    %1413 = vmatprep.subr.bf16.mxu0 %v363
    %1414 = vmatpush1.bf16.msra.mxu0 %v362
    %1415 = vmatprep.subr.bf16.mxu0 %v367
    %1416 = vmatpush1.bf16.msra.mxu0 %v366
    %1417 = vmatprep.subr.bf16.mxu0 %v371
    %1418 = vmatpush1.bf16.msra.mxu0 %v370
    %1419 = vmatprep.subr.bf16.mxu0 %v375
    %1420 = vmatpush1.bf16.msra.mxu0 %v374
    %1421 = vmatprep.subr.bf16.mxu0 %v379
    %1422 = vmatpush1.bf16.msra.mxu0 %v378
    %1423 = vmatprep.subr.bf16.mxu0 %v383
    %1424 = vmatpush1.bf16.msra.mxu0 %v382
    %1425 = vmatprep.subr.bf16.mxu0 %v387
    %1426 = vmatpush1.bf16.msra.mxu0 %v386
    %1427 = vmatprep.subr.bf16.mxu0 %v391
    %1428 = vmatpush1.bf16.msra.mxu0 %v390
    %1429 = vmatprep.subr.bf16.mxu0 %v395
    %1430 = vmatpush1.bf16.msra.mxu0 %v394
    %1431 = vmatprep.subr.bf16.mxu0 %v399
    %1432 = vmatpush1.bf16.msra.mxu0 %v398
    %1433 = vmatprep.subr.bf16.mxu0 %v403
    %1434 = vmatpush1.bf16.msra.mxu0 %v402
    %1435 = vmatprep.mubr.bf16.mxu0 %v1361
    %1436 = vmatmul.mubr.bf16.gmra.mrb[0].mxu0 %v1360
    %v1437 = vpop.f32.mrb[0].mxu0
    %v1438 = vadd.f32 %v139, %v1437
    %v1439 = vpop.f32.mrb[0].mxu0
    %v1440 = vadd.f32 %v143, %v1439
    %v1441 = vpop.f32.mrb[0].mxu0
    %v1442 = vpop.f32.mrb[0].mxu0
    %1443 = vdwg.mxu0
    %v1444 = vmul.f32 %v1397, 0.5
    %v1445 = vtanh.pop %v1444
    %v1446 = vmul.f32 %v1445, 0.5
    %v1447 = vadd.f32 %v1446, 0.5
    %v1448 = vmul.f32 %v1399, 0.5
    %v1449 = vtanh.pop %v1448
    %v1450 = vmul.f32 %v1449, 0.5
    %v1451 = vadd.f32 %v1450, 0.5
    %v1452 = vtanh.pop %v1438
    %v1453 = vmul.f32 %v1440, 0.5
    %v1454 = vtanh.pop %v1453
    %v1455 = vmul.f32 %v1454, 0.5
    %v1456 = vadd.f32 %v1455, 0.5
    %v1457 = vmul.f32 %v1451, %v1292
    %v1458 = vmul.f32 %v1447, %v1452
    %v1459 = vadd.f32 %v1457, %v1458
    %v1460 = vtanh.pop %v1459
    %v1461 = vmul.f32 %v1456, %v1460
    %s1462 = sadd.s32 %s122, 5
    %v1463 = vstv %s1462
    %vm1464 = vcmp.gt.s32.totalorder %v121, %v1463
    %v1465 = vsel %vm1464, 1, 0
    %1466 = vset.pattern.permute.xlu0 0
    %1467 = vperm.xlu0 %1466, %v1465
    %v1468 = vpop.permute.xlu0 %1467
    %vm1469 = vcmp.eq.s32.totalorder %v1468, 1
    %v1470 = vsel %vm1469, %v1461, %v1291
    %v1471 = vsel %vm1469, %v1459, %v1292
    %v1473 = vcombine.high %v1470, %v1470
    %v1475 = vunpack.c.l.s4 1966171168
    %v1476 = vunpack.c.0.s8 %v1475
    %v1477 = vlaneseq
    %v1478 = vshrl.u32 %v1477, 7
    %v1479 = vsub.s32 %v1476, %v1478
    %v1480 = vrot.slane %v1470, %v1479
    %v1482 = vunpack.c.l.s4 1966171168
    %v1483 = vunpack.c.0.s8 %v1482
    %v1484 = vlaneseq
    %v1485 = vshrl.u32 %v1484, 7
    %v1486 = vsub.s32 %v1483, %v1485
    %v1487 = vrot.slane %v1473, %v1486
    %v1488 = vcombine.high %v1480, %v1480
    %v1489 = vcombine.high %v1487, %v1487
    %v1491 = vunpack.c.l.s4 1966171168
    %v1492 = vunpack.c.0.s8 %v1491
    %v1493 = vlaneseq
    %v1494 = vshrl.u32 %v1493, 7
    %v1495 = vsub.s32 %v1492, %v1494
    %v1496 = vrot.slane %v1480, %v1495
    %v1498 = vunpack.c.l.s4 1966171168
    %v1499 = vunpack.c.0.s8 %v1498
    %v1500 = vlaneseq
    %v1501 = vshrl.u32 %v1500, 7
    %v1502 = vsub.s32 %v1499, %v1501
    %v1503 = vrot.slane %v1487, %v1502
    %v1505 = vunpack.c.l.s4 1966171168
    %v1506 = vunpack.c.0.s8 %v1505
    %v1507 = vlaneseq
    %v1508 = vshrl.u32 %v1507, 7
    %v1509 = vsub.s32 %v1506, %v1508
    %v1510 = vrot.slane %v1488, %v1509
    %v1512 = vunpack.c.l.s4 1966171168
    %v1513 = vunpack.c.0.s8 %v1512
    %v1514 = vlaneseq
    %v1515 = vshrl.u32 %v1514, 7
    %v1516 = vsub.s32 %v1513, %v1515
    %v1517 = vrot.slane %v1489, %v1516
    %v1518 = vcombine.high %v1496, %v1496
    %v1519 = vcombine.high %v1503, %v1503
    %v1520 = vcombine.high %v1510, %v1510
    %v1521 = vcombine.high %v1517, %v1517
    %1530 = vst [vmem:[#allocation9 + $0x5] sm:$0x1] %v1496
    %1531 = vst [vmem:[#allocation9 + $0xd] sm:$0x1] %v1510
    %1532 = vst [vmem:[#allocation9 + $0x15] sm:$0x1] %v1518
    %1533 = vst [vmem:[#allocation9 + $0x1d] sm:$0x1] %v1520
    %1534 = vst [vmem:[#allocation9 + $0x25] sm:$0x1] %v1503
    %1535 = vst [vmem:[#allocation9 + $0x2d] sm:$0x1] %v1517
    %1536 = vst [vmem:[#allocation9 + $0x35] sm:$0x1] %v1519
    %1537 = vst [vmem:[#allocation9 + $0x3d] sm:$0x1] %v1521
    %s1538 = scalar_lea.vmem [#allocation4], 24
    %v1539 = vld [vmem:[%s1538] sm:$0xf]
    %v1540 = vpack.c.bf16 %v1470, %v1470
    %1541 = vmatprep.subr.bf16.mxu0 %v341
    %1542 = vmatpush1.bf16.msra.mxu0 %v340
    %1543 = vmatprep.subr.bf16.mxu0 %v345
    %1544 = vmatpush1.bf16.msra.mxu0 %v344
    %1545 = vmatprep.subr.bf16.mxu0 %v349
    %1546 = vmatpush1.bf16.msra.mxu0 %v348
    %1547 = vmatprep.subr.bf16.mxu0 %v353
    %1548 = vmatpush1.bf16.msra.mxu0 %v352
    %1549 = vmatprep.subr.bf16.mxu0 %v357
    %1550 = vmatpush1.bf16.msra.mxu0 %v356
    %1551 = vmatprep.subr.bf16.mxu0 %v361
    %1552 = vmatpush1.bf16.msra.mxu0 %v360
    %1553 = vmatprep.subr.bf16.mxu0 %v365
    %1554 = vmatpush1.bf16.msra.mxu0 %v364
    %1555 = vmatprep.subr.bf16.mxu0 %v369
    %1556 = vmatpush1.bf16.msra.mxu0 %v368
    %1557 = vmatprep.subr.bf16.mxu0 %v373
    %1558 = vmatpush1.bf16.msra.mxu0 %v372
    %1559 = vmatprep.subr.bf16.mxu0 %v377
    %1560 = vmatpush1.bf16.msra.mxu0 %v376
    %1561 = vmatprep.subr.bf16.mxu0 %v381
    %1562 = vmatpush1.bf16.msra.mxu0 %v380
    %1563 = vmatprep.subr.bf16.mxu0 %v385
    %1564 = vmatpush1.bf16.msra.mxu0 %v384
    %1565 = vmatprep.subr.bf16.mxu0 %v389
    %1566 = vmatpush1.bf16.msra.mxu0 %v388
    %1567 = vmatprep.subr.bf16.mxu0 %v393
    %1568 = vmatpush1.bf16.msra.mxu0 %v392
    %1569 = vmatprep.subr.bf16.mxu0 %v397
    %1570 = vmatpush1.bf16.msra.mxu0 %v396
    %1571 = vmatprep.subr.bf16.mxu0 %v401
    %1572 = vmatpush1.bf16.msra.mxu0 %v400
    %1573 = vmatprep.mubr.bf16.mxu0 %v1540
    %1574 = vmatmul.mubr.bf16.gmra.mrb[0].mxu0 %v1539
    %v1575 = vpop.f32.mrb[0].mxu0
    %v1576 = vadd.f32 %v131, %v1575
    %v1577 = vpop.f32.mrb[0].mxu0
    %v1578 = vadd.f32 %v135, %v1577
    %v1579 = vpop.f32.mrb[0].mxu0
    %v1580 = vpop.f32.mrb[0].mxu0
    %1581 = vdwg.mxu0
    %1582 = vmatprep.subr.bf16.mxu0 %v343
    %1583 = vmatpush1.bf16.msra.mxu0 %v342
    %1584 = vmatprep.subr.bf16.mxu0 %v347
    %1585 = vmatpush1.bf16.msra.mxu0 %v346
    %1586 = vmatprep.subr.bf16.mxu0 %v351
    %1587 = vmatpush1.bf16.msra.mxu0 %v350
    %1588 = vmatprep.subr.bf16.mxu0 %v355
    %1589 = vmatpush1.bf16.msra.mxu0 %v354
    %1590 = vmatprep.subr.bf16.mxu0 %v359
    %1591 = vmatpush1.bf16.msra.mxu0 %v358
    %1592 = vmatprep.subr.bf16.mxu0 %v363
    %1593 = vmatpush1.bf16.msra.mxu0 %v362
    %1594 = vmatprep.subr.bf16.mxu0 %v367
    %1595 = vmatpush1.bf16.msra.mxu0 %v366
    %1596 = vmatprep.subr.bf16.mxu0 %v371
    %1597 = vmatpush1.bf16.msra.mxu0 %v370
    %1598 = vmatprep.subr.bf16.mxu0 %v375
    %1599 = vmatpush1.bf16.msra.mxu0 %v374
    %1600 = vmatprep.subr.bf16.mxu0 %v379
    %1601 = vmatpush1.bf16.msra.mxu0 %v378
    %1602 = vmatprep.subr.bf16.mxu0 %v383
    %1603 = vmatpush1.bf16.msra.mxu0 %v382
    %1604 = vmatprep.subr.bf16.mxu0 %v387
    %1605 = vmatpush1.bf16.msra.mxu0 %v386
    %1606 = vmatprep.subr.bf16.mxu0 %v391
    %1607 = vmatpush1.bf16.msra.mxu0 %v390
    %1608 = vmatprep.subr.bf16.mxu0 %v395
    %1609 = vmatpush1.bf16.msra.mxu0 %v394
    %1610 = vmatprep.subr.bf16.mxu0 %v399
    %1611 = vmatpush1.bf16.msra.mxu0 %v398
    %1612 = vmatprep.subr.bf16.mxu0 %v403
    %1613 = vmatpush1.bf16.msra.mxu0 %v402
    %1614 = vmatprep.mubr.bf16.mxu0 %v1540
    %1615 = vmatmul.mubr.bf16.gmra.mrb[0].mxu0 %v1539
    %v1616 = vpop.f32.mrb[0].mxu0
    %v1617 = vadd.f32 %v139, %v1616
    %v1618 = vpop.f32.mrb[0].mxu0
    %v1619 = vadd.f32 %v143, %v1618
    %v1620 = vpop.f32.mrb[0].mxu0
    %v1621 = vpop.f32.mrb[0].mxu0
    %1622 = vdwg.mxu0
    %v1623 = vmul.f32 %v1576, 0.5
    %v1624 = vtanh.pop %v1623
    %v1625 = vmul.f32 %v1624, 0.5
    %v1626 = vadd.f32 %v1625, 0.5
    %v1627 = vmul.f32 %v1578, 0.5
    %v1628 = vtanh.pop %v1627
    %v1629 = vmul.f32 %v1628, 0.5
    %v1630 = vadd.f32 %v1629, 0.5
    %v1631 = vtanh.pop %v1617
    %v1632 = vmul.f32 %v1619, 0.5
    %v1633 = vtanh.pop %v1632
    %v1634 = vmul.f32 %v1633, 0.5
    %v1635 = vadd.f32 %v1634, 0.5
    %v1636 = vmul.f32 %v1630, %v1471
    %v1637 = vmul.f32 %v1626, %v1631
    %v1638 = vadd.f32 %v1636, %v1637
    %v1639 = vtanh.pop %v1638
    %v1640 = vmul.f32 %v1635, %v1639
    %s1641 = sadd.s32 %s122, 6
    %v1642 = vstv %s1641
    %vm1643 = vcmp.gt.s32.totalorder %v121, %v1642
    %v1644 = vsel %vm1643, 1, 0
    %1645 = vset.pattern.permute.xlu0 0
    %1646 = vperm.xlu0 %1645, %v1644
    %v1647 = vpop.permute.xlu0 %1646
    %vm1648 = vcmp.eq.s32.totalorder %v1647, 1
    %v1649 = vsel %vm1648, %v1640, %v1470
    %v1650 = vsel %vm1648, %v1638, %v1471
    %v1652 = vcombine.high %v1649, %v1649
    %v1654 = vunpack.c.l.s4 1966171168
    %v1655 = vunpack.c.0.s8 %v1654
    %v1656 = vlaneseq
    %v1657 = vshrl.u32 %v1656, 7
    %v1658 = vsub.s32 %v1655, %v1657
    %v1659 = vrot.slane %v1649, %v1658
    %v1661 = vunpack.c.l.s4 1966171168
    %v1662 = vunpack.c.0.s8 %v1661
    %v1663 = vlaneseq
    %v1664 = vshrl.u32 %v1663, 7
    %v1665 = vsub.s32 %v1662, %v1664
    %v1666 = vrot.slane %v1652, %v1665
    %v1667 = vcombine.high %v1659, %v1659
    %v1668 = vcombine.high %v1666, %v1666
    %v1670 = vunpack.c.l.s4 1966171168
    %v1671 = vunpack.c.0.s8 %v1670
    %v1672 = vlaneseq
    %v1673 = vshrl.u32 %v1672, 7
    %v1674 = vsub.s32 %v1671, %v1673
    %v1675 = vrot.slane %v1659, %v1674
    %v1677 = vunpack.c.l.s4 1966171168
    %v1678 = vunpack.c.0.s8 %v1677
    %v1679 = vlaneseq
    %v1680 = vshrl.u32 %v1679, 7
    %v1681 = vsub.s32 %v1678, %v1680
    %v1682 = vrot.slane %v1666, %v1681
    %v1684 = vunpack.c.l.s4 1966171168
    %v1685 = vunpack.c.0.s8 %v1684
    %v1686 = vlaneseq
    %v1687 = vshrl.u32 %v1686, 7
    %v1688 = vsub.s32 %v1685, %v1687
    %v1689 = vrot.slane %v1667, %v1688
    %v1691 = vunpack.c.l.s4 1966171168
    %v1692 = vunpack.c.0.s8 %v1691
    %v1693 = vlaneseq
    %v1694 = vshrl.u32 %v1693, 7
    %v1695 = vsub.s32 %v1692, %v1694
    %v1696 = vrot.slane %v1668, %v1695
    %v1697 = vcombine.high %v1675, %v1675
    %v1698 = vcombine.high %v1682, %v1682
    %v1699 = vcombine.high %v1689, %v1689
    %v1700 = vcombine.high %v1696, %v1696
    %1709 = vst [vmem:[#allocation9 + $0x6] sm:$0x1] %v1675
    %1710 = vst [vmem:[#allocation9 + $0xe] sm:$0x1] %v1689
    %1711 = vst [vmem:[#allocation9 + $0x16] sm:$0x1] %v1697
    %1712 = vst [vmem:[#allocation9 + $0x1e] sm:$0x1] %v1699
    %1713 = vst [vmem:[#allocation9 + $0x26] sm:$0x1] %v1682
    %1714 = vst [vmem:[#allocation9 + $0x2e] sm:$0x1] %v1696
    %1715 = vst [vmem:[#allocation9 + $0x36] sm:$0x1] %v1698
    %1716 = vst [vmem:[#allocation9 + $0x3e] sm:$0x1] %v1700
    %s1717 = scalar_lea.vmem [#allocation4], 28
    %v1718 = vld [vmem:[%s1717] sm:$0xf]
    %v1719 = vpack.c.bf16 %v1649, %v1649
    %1720 = vmatprep.subr.bf16.mxu0 %v341
    %1721 = vmatpush1.bf16.msra.mxu0 %v340
    %1722 = vmatprep.subr.bf16.mxu0 %v345
    %1723 = vmatpush1.bf16.msra.mxu0 %v344
    %1724 = vmatprep.subr.bf16.mxu0 %v349
    %1725 = vmatpush1.bf16.msra.mxu0 %v348
    %1726 = vmatprep.subr.bf16.mxu0 %v353
    %1727 = vmatpush1.bf16.msra.mxu0 %v352
    %1728 = vmatprep.subr.bf16.mxu0 %v357
    %1729 = vmatpush1.bf16.msra.mxu0 %v356
    %1730 = vmatprep.subr.bf16.mxu0 %v361
    %1731 = vmatpush1.bf16.msra.mxu0 %v360
    %1732 = vmatprep.subr.bf16.mxu0 %v365
    %1733 = vmatpush1.bf16.msra.mxu0 %v364
    %1734 = vmatprep.subr.bf16.mxu0 %v369
    %1735 = vmatpush1.bf16.msra.mxu0 %v368
    %1736 = vmatprep.subr.bf16.mxu0 %v373
    %1737 = vmatpush1.bf16.msra.mxu0 %v372
    %1738 = vmatprep.subr.bf16.mxu0 %v377
    %1739 = vmatpush1.bf16.msra.mxu0 %v376
    %1740 = vmatprep.subr.bf16.mxu0 %v381
    %1741 = vmatpush1.bf16.msra.mxu0 %v380
    %1742 = vmatprep.subr.bf16.mxu0 %v385
    %1743 = vmatpush1.bf16.msra.mxu0 %v384
    %1744 = vmatprep.subr.bf16.mxu0 %v389
    %1745 = vmatpush1.bf16.msra.mxu0 %v388
    %1746 = vmatprep.subr.bf16.mxu0 %v393
    %1747 = vmatpush1.bf16.msra.mxu0 %v392
    %1748 = vmatprep.subr.bf16.mxu0 %v397
    %1749 = vmatpush1.bf16.msra.mxu0 %v396
    %1750 = vmatprep.subr.bf16.mxu0 %v401
    %1751 = vmatpush1.bf16.msra.mxu0 %v400
    %1752 = vmatprep.mubr.bf16.mxu0 %v1719
    %1753 = vmatmul.mubr.bf16.gmra.mrb[0].mxu0 %v1718
    %v1754 = vpop.f32.mrb[0].mxu0
    %v1755 = vadd.f32 %v131, %v1754
    %v1756 = vpop.f32.mrb[0].mxu0
    %v1757 = vadd.f32 %v135, %v1756
    %v1758 = vpop.f32.mrb[0].mxu0
    %v1759 = vpop.f32.mrb[0].mxu0
    %1760 = vdwg.mxu0
    %1761 = vmatprep.subr.bf16.mxu0 %v343
    %1762 = vmatpush1.bf16.msra.mxu0 %v342
    %1763 = vmatprep.subr.bf16.mxu0 %v347
    %1764 = vmatpush1.bf16.msra.mxu0 %v346
    %1765 = vmatprep.subr.bf16.mxu0 %v351
    %1766 = vmatpush1.bf16.msra.mxu0 %v350
    %1767 = vmatprep.subr.bf16.mxu0 %v355
    %1768 = vmatpush1.bf16.msra.mxu0 %v354
    %1769 = vmatprep.subr.bf16.mxu0 %v359
    %1770 = vmatpush1.bf16.msra.mxu0 %v358
    %1771 = vmatprep.subr.bf16.mxu0 %v363
    %1772 = vmatpush1.bf16.msra.mxu0 %v362
    %1773 = vmatprep.subr.bf16.mxu0 %v367
    %1774 = vmatpush1.bf16.msra.mxu0 %v366
    %1775 = vmatprep.subr.bf16.mxu0 %v371
    %1776 = vmatpush1.bf16.msra.mxu0 %v370
    %1777 = vmatprep.subr.bf16.mxu0 %v375
    %1778 = vmatpush1.bf16.msra.mxu0 %v374
    %1779 = vmatprep.subr.bf16.mxu0 %v379
    %1780 = vmatpush1.bf16.msra.mxu0 %v378
    %1781 = vmatprep.subr.bf16.mxu0 %v383
    %1782 = vmatpush1.bf16.msra.mxu0 %v382
    %1783 = vmatprep.subr.bf16.mxu0 %v387
    %1784 = vmatpush1.bf16.msra.mxu0 %v386
    %1785 = vmatprep.subr.bf16.mxu0 %v391
    %1786 = vmatpush1.bf16.msra.mxu0 %v390
    %1787 = vmatprep.subr.bf16.mxu0 %v395
    %1788 = vmatpush1.bf16.msra.mxu0 %v394
    %1789 = vmatprep.subr.bf16.mxu0 %v399
    %1790 = vmatpush1.bf16.msra.mxu0 %v398
    %1791 = vmatprep.subr.bf16.mxu0 %v403
    %1792 = vmatpush1.bf16.msra.mxu0 %v402
    %1793 = vmatprep.mubr.bf16.mxu0 %v1719
    %1794 = vmatmul.mubr.bf16.gmra.mrb[0].mxu0 %v1718
    %v1795 = vpop.f32.mrb[0].mxu0
    %v1796 = vadd.f32 %v139, %v1795
    %v1797 = vpop.f32.mrb[0].mxu0
    %v1798 = vadd.f32 %v143, %v1797
    %v1799 = vpop.f32.mrb[0].mxu0
    %v1800 = vpop.f32.mrb[0].mxu0
    %1801 = vdwg.mxu0
    %v1802 = vmul.f32 %v1755, 0.5
    %v1803 = vtanh.pop %v1802
    %v1804 = vmul.f32 %v1803, 0.5
    %v1805 = vadd.f32 %v1804, 0.5
    %v1806 = vmul.f32 %v1757, 0.5
    %v1807 = vtanh.pop %v1806
    %v1808 = vmul.f32 %v1807, 0.5
    %v1809 = vadd.f32 %v1808, 0.5
    %v1810 = vtanh.pop %v1796
    %v1811 = vmul.f32 %v1798, 0.5
    %v1812 = vtanh.pop %v1811
    %v1813 = vmul.f32 %v1812, 0.5
    %v1814 = vadd.f32 %v1813, 0.5
    %v1815 = vmul.f32 %v1809, %v1650
    %v1816 = vmul.f32 %v1805, %v1810
    %v1817 = vadd.f32 %v1815, %v1816
    %v1818 = vtanh.pop %v1817
    %v1819 = vmul.f32 %v1814, %v1818
    %s1820 = sadd.s32 %s122, 7
    %v1821 = vstv %s1820
    %vm1822 = vcmp.gt.s32.totalorder %v121, %v1821
    %v1823 = vsel %vm1822, 1, 0
    %1824 = vset.pattern.permute.xlu0 0
    %1825 = vperm.xlu0 %1824, %v1823
    %v1826 = vpop.permute.xlu0 %1825
    %vm1827 = vcmp.eq.s32.totalorder %v1826, 1
    %v1828 = vsel %vm1827, %v1819, %v1649
    %v1829 = vsel %vm1827, %v1817, %v1650
    %v1831 = vcombine.high %v1828, %v1828
    %v1833 = vunpack.c.l.s4 1966171168
    %v1834 = vunpack.c.0.s8 %v1833
    %v1835 = vlaneseq
    %v1836 = vshrl.u32 %v1835, 7
    %v1837 = vsub.s32 %v1834, %v1836
    %v1838 = vrot.slane %v1828, %v1837
    %v1840 = vunpack.c.l.s4 1966171168
    %v1841 = vunpack.c.0.s8 %v1840
    %v1842 = vlaneseq
    %v1843 = vshrl.u32 %v1842, 7
    %v1844 = vsub.s32 %v1841, %v1843
    %v1845 = vrot.slane %v1831, %v1844
    %v1846 = vcombine.high %v1838, %v1838
    %v1847 = vcombine.high %v1845, %v1845
    %v1849 = vunpack.c.l.s4 1966171168
    %v1850 = vunpack.c.0.s8 %v1849
    %v1851 = vlaneseq
    %v1852 = vshrl.u32 %v1851, 7
    %v1853 = vsub.s32 %v1850, %v1852
    %v1854 = vrot.slane %v1838, %v1853
    %v1856 = vunpack.c.l.s4 1966171168
    %v1857 = vunpack.c.0.s8 %v1856
    %v1858 = vlaneseq
    %v1859 = vshrl.u32 %v1858, 7
    %v1860 = vsub.s32 %v1857, %v1859
    %v1861 = vrot.slane %v1845, %v1860
    %v1863 = vunpack.c.l.s4 1966171168
    %v1864 = vunpack.c.0.s8 %v1863
    %v1865 = vlaneseq
    %v1866 = vshrl.u32 %v1865, 7
    %v1867 = vsub.s32 %v1864, %v1866
    %v1868 = vrot.slane %v1846, %v1867
    %v1870 = vunpack.c.l.s4 1966171168
    %v1871 = vunpack.c.0.s8 %v1870
    %v1872 = vlaneseq
    %v1873 = vshrl.u32 %v1872, 7
    %v1874 = vsub.s32 %v1871, %v1873
    %v1875 = vrot.slane %v1847, %v1874
    %v1876 = vcombine.high %v1854, %v1854
    %v1877 = vcombine.high %v1861, %v1861
    %v1878 = vcombine.high %v1868, %v1868
    %v1879 = vcombine.high %v1875, %v1875
    %1888 = vst [vmem:[#allocation9 + $0x7] sm:$0x1] %v1854
    %1889 = vst [vmem:[#allocation9 + $0xf] sm:$0x1] %v1868
    %1890 = vst [vmem:[#allocation9 + $0x17] sm:$0x1] %v1876
    %1891 = vst [vmem:[#allocation9 + $0x1f] sm:$0x1] %v1878
    %1892 = vst [vmem:[#allocation9 + $0x27] sm:$0x1] %v1861
    %1893 = vst [vmem:[#allocation9 + $0x2f] sm:$0x1] %v1875
    %1894 = vst [vmem:[#allocation9 + $0x37] sm:$0x1] %v1877
    %1895 = vst [vmem:[#allocation9 + $0x3f] sm:$0x1] %v1879
    %1896 = vst [vmem:[#allocation2] sm:$0xff] %v1828
    %1897 = vst [vmem:[#allocation3] sm:$0xff] %v1829
    // Predicated region
    $region30: #{tpu_custom_call.1} parent=1 // pred_check
      %p1898 = pneg %p50
    $region31: #{tpu_custom_call.1} parent=1 // pred_check_branch
      %1900 = sbr.rel (%p1898) target = $region33
    $region32: #{tpu_custom_call.1} parent=1 // pred_region
      %1901 = vst [vmem:[#allocation10] sm:$0xff] %v1828
      %1902 = vst [vmem:[#allocation12] sm:$0xff] %v1829
    $region33: #{tpu_custom_call.1} parent=1 // pred_fallthru
      _
    // Predicated region
    $region34: #{tpu_custom_call.1} parent=1 // pred_check
      _
    $region35: #{tpu_custom_call.1} parent=1 // pred_check_branch
      %1904 = sbr.rel (0) target = $region37
    $region36: #{tpu_custom_call.1} parent=1 // pred_region
      %s1906 = ssub.s32 1024, 1024
      %1907 = vsyncadd [#allocation6], %s1906
      %s1908 = sshll.u32 [#allocation9], 4
      %s1909 = int_to_ptr.vmem [resolvable:$true] %s1908
      %1914 = dma.vmem_to_hbm [thread:$0]  %s1909, 1024, %s4, [#allocation6], 128, 128, 8
    $region37: #{tpu_custom_call.1} parent=1 // pred_fallthru
      _
    // Predicated region
    $region38: #{tpu_custom_call.1} parent=1 // pred_check
      _
    $region39: #{tpu_custom_call.1} parent=1 // pred_check_branch
      %1916 = sbr.rel (0) target = $region41
    $region40: #{tpu_custom_call.1} parent=1 // pred_region
      %s1918 = ssub.s32 128, 128
      %1919 = vsyncadd [#allocation11], %s1918
      %s1921 = sshll.u32 [#allocation10], 4
      %s1922 = int_to_ptr.vmem [resolvable:$true] %s1921
      %1924 = dma.vmem_to_hbm [thread:$0]  %s1922, 128, %s5, [#allocation11]
    $region41: #{tpu_custom_call.1} parent=1 // pred_fallthru
      _
    // Predicated region
    $region42: #{tpu_custom_call.1} parent=1 // pred_check
      _
    $region43: #{tpu_custom_call.1} parent=1 // pred_check_branch
      %1926 = sbr.rel (0) target = $region45
    $region44: #{tpu_custom_call.1} parent=1 // pred_region
      %s1928 = ssub.s32 128, 128
      %1929 = vsyncadd [#allocation11], %s1928
      %s1931 = sshll.u32 [#allocation12], 4
      %s1932 = int_to_ptr.vmem [resolvable:$true] %s1931
      %1934 = dma.vmem_to_hbm [thread:$0]  %s1932, 128, %s6, [#allocation11]
    $region45: #{tpu_custom_call.1} parent=1 // pred_fallthru
      _
    // Predicated region
    $region46: #{tpu_custom_call.1} parent=1 // pred_check
      _
    $region47: #{tpu_custom_call.1} parent=1 // pred_check_branch
      %1936 = sbr.rel (0) target = $region49
    $region48: #{tpu_custom_call.1} parent=1 // pred_region
      %1937 = dma.done [#allocation6], 1024
    $region49: #{tpu_custom_call.1} parent=1 // pred_fallthru
      _
    // Predicated region
    $region50: #{tpu_custom_call.1} parent=1 // pred_check
      _
    $region51: #{tpu_custom_call.1} parent=1 // pred_check_branch
      %1939 = sbr.rel (0) target = $region53
    $region52: #{tpu_custom_call.1} parent=1 // pred_region
      %1940 = dma.done [#allocation11], 128
    $region53: #{tpu_custom_call.1} parent=1 // pred_fallthru
      _
    // Predicated region
    $region54: #{tpu_custom_call.1} parent=1 // pred_check
      _
    $region55: #{tpu_custom_call.1} parent=1 // pred_check_branch
      %1942 = sbr.rel (0) target = $region57
    $region56: #{tpu_custom_call.1} parent=1 // pred_region
      %1943 = dma.done [#allocation11], 128
    $region57: #{tpu_custom_call.1} parent=1 // pred_fallthru
      _
    %1944 = vsyncpa [#allocation5], 1
    %1945 = vsyncpa [#allocation8], 1
    %1946 = vsyncpa [#allocation6], 1
    %1947 = vsyncpa [#allocation11], 1

</llo_original>
